<compile_context>
chip_gen: v6e
topology: v6e:2x2x1
jax: 0.10.0
libtpu: 0.0.40
codegen_flags: <defaults>
</compile_context>

<pallas_src>
import functools

import jax
import jax.numpy as jnp
from jax.experimental import pallas as pl
from jax.experimental.pallas import tpu as pltpu


# ----------------------------------------------------------------------------
# Pallas kernel:  O = [ReLU on rows >= relu_start](W @ X + b) + add
#   X : (Cin, P)   W : (Cout, Cin)   b : (Cout, 1)   add/O : (Cout, P)
# ----------------------------------------------------------------------------
def _make_conv_kernel(relu_start, cout, has_bias, has_add):
    def kernel(*refs):
        x_ref, w_ref = refs[0], refs[1]
        idx = 2
        b_ref = refs[idx] if has_bias else None
        idx += int(has_bias)
        a_ref = refs[idx] if has_add else None
        idx += int(has_add)
        o_ref = refs[idx]

        acc = jnp.dot(w_ref[...], x_ref[...], preferred_element_type=jnp.float32)
        if has_bias:
            acc = acc + b_ref[...]                       # (Cout, 1) lane-broadcast
        if relu_start <= 0:                              # ReLU on every row
            acc = jnp.maximum(acc, 0.0)
        elif relu_start < cout:                          # ReLU on a suffix of rows
            rows = jax.lax.broadcasted_iota(jnp.int32, acc.shape, 0)
            acc = jnp.where(rows >= relu_start, jnp.maximum(acc, 0.0), acc)
        if has_add:
            acc = acc + a_ref[...]
        o_ref[...] = acc.astype(o_ref.dtype)

    return kernel


def conv1x1_cp(x_cp, w, bias=None, relu_start=None, add=None):
    """Fused 1x1 conv in (C, P) layout.

    x_cp: (Cin, P) f32, w: (Cout, Cin) f32 (BN scale already folded in),
    bias: (Cout,) or None, relu_start: first output row that gets ReLU
    (None -> no ReLU), add: optional (Cout, P) residual.  Returns (Cout, P) f32.
    """
    cin, p = x_cp.shape
    cout = w.shape[0]
    if relu_start is None:
        relu_start = cout
    has_bias = bias is not None
    has_add = add is not None

    args = [x_cp.astype(jnp.float32), w.astype(jnp.float32)]
    in_specs = [
        pl.BlockSpec((cin, p), lambda i: (0, 0)),
        pl.BlockSpec((cout, cin), lambda i: (0, 0)),
    ]
    if has_bias:
        args.append(bias.reshape(cout, 1).astype(jnp.float32))
        in_specs.append(pl.BlockSpec((cout, 1), lambda i: (0, 0)))
    if has_add:
        args.append(add.astype(jnp.float32))
        in_specs.append(pl.BlockSpec((cout, p), lambda i: (0, 0)))

    kernel = _make_conv_kernel(relu_start, cout, has_bias, has_add)
    return pl.pallas_call(
        kernel,
        out_shape=jax.ShapeDtypeStruct((cout, p), jnp.float32),
        grid=(1,),                                    # single step: whole op fits VMEM
        in_specs=in_specs,
        out_specs=pl.BlockSpec((cout, p), lambda i: (0, 0)),
        compiler_params=pltpu.CompilerParams(dimension_semantics=("arbitrary",)),
    )(*args)


# ----------------------------------------------------------------------------
# FFT helpers in (C, N, H, W) layout.
# TODO(synk): FFT has no Pallas TPU primitive; rfft2/irfft2 stay in plain JAX (XLA).
# ----------------------------------------------------------------------------
def _fft_features(x_cnhw):
    """rfft2 + interleaved real/imag channels -> ((2C, N*H*Wf), dims)."""
    c, n, h, w = x_cnhw.shape
    ff = jnp.fft.rfft2(x_cnhw, norm="ortho")                  # (c, n, h, wf)
    wf = ff.shape[-1]
    feat = jnp.stack([jnp.real(ff), jnp.imag(ff)], axis=1)    # (c, 2, n, h, wf)
    return feat.reshape(2 * c, n * h * wf), (n, h, w, wf)


def _ifft_from_features(feat, dims):
    n, h, w, wf = dims
    c = feat.shape[0] // 2
    feat = feat.reshape(c, 2, n, h, wf)
    comp = jax.lax.complex(feat[:, 0], feat[:, 1])
    return jnp.fft.irfft2(comp, s=(h, w), norm="ortho")       # (c, n, h, w)


def _spectral_tail(prep, y_cp, n, h, w):
    """SpectralTransform after conv1: returns conv2's input, (half, P)."""
    half = y_cp.shape[0]
    y = y_cp.reshape(half, n, h, w)

    fu_feat, fu_dims = _fft_features(y)

    if "w_fu_lfu" in prep:                                    # enable_lfu == True
        # LFU spatial shuffle (mirrors torch.split/cat in channel-first layout).
        split_no = 2
        ctu = max(1, half // split_no ** 2)
        xs = y[:ctu]
        xs = jnp.concatenate(jnp.split(xs, split_no, axis=2), axis=0)
        xs = jnp.concatenate(jnp.split(xs, split_no, axis=3), axis=0)
        if xs.shape[0] < half:
            pad = half - xs.shape[0]
            xs = jnp.concatenate(
                [xs, jnp.zeros((pad,) + xs.shape[1:], xs.dtype)], axis=0)
        elif xs.shape[0] > half:
            xs = xs[:half]
        lfu_feat, lfu_dims = _fft_features(xs)

        # Fuse fu & lfu 1x1 convs: block-diagonal weight, lane-pad the smaller P.
        p_fu, p_lfu = fu_feat.shape[1], lfu_feat.shape[1]
        assert p_fu >= p_lfu
        lfu_feat_pad = jnp.pad(lfu_feat, ((0, 0), (0, p_fu - p_lfu)))
        feat_all = jnp.concatenate([fu_feat, lfu_feat_pad], axis=0)
        out_all = conv1x1_cp(feat_all, prep["w_fu_lfu"], bias=prep["b_fu_lfu"],
                             relu_start=0)
        fu_out = _ifft_from_features(out_all[:2 * half], fu_dims)
        lfu_out = _ifft_from_features(out_all[2 * half:, :p_lfu], lfu_dims)
        lfu_out = jnp.tile(lfu_out, (1, 1, split_no, split_no))
        total = y + fu_out + lfu_out
    else:
        fu_out_feat = conv1x1_cp(fu_feat, prep["w_fu"], bias=prep["b_fu"],
                                 relu_start=0)
        total = y + _ifft_from_features(fu_out_feat, fu_dims)

    return total.reshape(half, n * h * w)


# ----------------------------------------------------------------------------
# FFC forward (3 pallas_calls total)
# ----------------------------------------------------------------------------
def ffc_forward(prep, x_l, x_g):
    n, in_cl, h, w = x_l.shape
    in_cg = x_g.shape[1]
    half = prep["w_conv2"].shape[1]
    out_cg = prep["w_conv2"].shape[0]
    out_cl = prep["w_entry"].shape[0] - out_cg - half
    p = n * h * w

    # NCHW -> (C, P) once at the boundary (pixels end up on the lane axis).
    x = jnp.concatenate([x_l, x_g], axis=1)
    x_cp = jnp.transpose(x, (1, 0, 2, 3)).reshape(in_cl + in_cg, p).astype(jnp.float32)

    # Call 1: [convl2l+convg2l | convl2g | spectral conv1(+BN+ReLU)] fused.
    ent = conv1x1_cp(x_cp, prep["w_entry"], bias=prep["b_entry"],
                     relu_start=out_cl + out_cg)
    out_xl_cp = ent[:out_cl]
    l2g_cp = ent[out_cl:out_cl + out_cg]
    y_cp = ent[out_cl + out_cg:]

    # Call 2 (inside): fused FourierUnit + LFU conv.
    conv2_in = _spectral_tail(prep, y_cp, n, h, w)

    # Call 3: conv2 with the convl2g residual fused in -> out_xg directly.
    out_xg_cp = conv1x1_cp(conv2_in, prep["w_conv2"], add=l2g_cp)

    out_xl = jnp.transpose(out_xl_cp.reshape(out_cl, n, h, w), (1, 0, 2, 3))
    out_xg = jnp.transpose(out_xg_cp.reshape(out_cg, n, h, w), (1, 0, 2, 3))
    return out_xl, out_xg


# ----------------------------------------------------------------------------
# Parameters: raw (PyTorch-like) init + one-time prep (BN folding, weight fusion)
# ----------------------------------------------------------------------------
def init_raw_params(key, in_cl, in_cg, out_cl, out_cg):
    ks = jax.random.split(key, 7)
    half = out_cg // 2

    def wconv(k, o, i):
        return jax.random.normal(k, (o, i), jnp.float32) * 0.1

    def bn_eval(c, eps=1e-5):
        gamma = jnp.ones((c,), jnp.float32)
        beta = jnp.zeros((c,), jnp.float32)
        mean = jnp.zeros((c,), jnp.float32)
        var = jnp.ones((c,), jnp.float32)
        scale = gamma / jnp.sqrt(var + eps)
        return scale, beta - mean * scale

    c1_s, c1_b = bn_eval(half)
    fu_s, fu_b = bn_eval(2 * half)
    lfu_s, lfu_b = bn_eval(2 * half)
    return dict(
        w_l2l=wconv(ks[0], out_cl, in_cl), w_g2l=wconv(ks[1], out_cl, in_cg),
        w_l2g=wconv(ks[2], out_cg, in_cl),
        conv1_w=wconv(ks[3], half, in_cg), conv1_scale=c1_s, conv1_bias=c1_b,
        fu_w=wconv(ks[4], 2 * half, 2 * half), fu_scale=fu_s, fu_bias=fu_b,
        lfu_w=wconv(ks[5], 2 * half, 2 * half), lfu_scale=lfu_s, lfu_bias=lfu_b,
        conv2_w=wconv(ks[6], out_cg, half),
    )


def prepare_params(raw, enable_lfu=True):
    """Fold BN scales into weights and build the fused weight matrices (once)."""
    out_cl, in_cl = raw["w_l2l"].shape
    out_cg = raw["w_l2g"].shape[0]
    in_cg = raw["w_g2l"].shape[1]
    half = raw["conv1_w"].shape[0]

    conv1_w = raw["conv1_w"] * raw["conv1_scale"][:, None]
    w_entry = jnp.concatenate([
        jnp.concatenate([raw["w_l2l"], raw["w_g2l"]], axis=1),
        jnp.concatenate([raw["w_l2g"], jnp.zeros((out_cg, in_cg), jnp.float32)], axis=1),
        jnp.concatenate([jnp.zeros((half, in_cl), jnp.float32), conv1_w], axis=1),
    ], axis=0)
    b_entry = jnp.concatenate(
        [jnp.zeros((out_cl + out_cg,), jnp.float32), raw["conv1_bias"]])

    fu_w = raw["fu_w"] * raw["fu_scale"][:, None]
    prep = dict(w_entry=w_entry, b_entry=b_entry, w_conv2=raw["conv2_w"])
    if enable_lfu:
        lfu_w = raw["lfu_w"] * raw["lfu_scale"][:, None]
        z = jnp.zeros_like(fu_w)
        prep["w_fu_lfu"] = jnp.concatenate([
            jnp.concatenate([fu_w, z], axis=1),
            jnp.concatenate([z, lfu_w], axis=1)], axis=0)
        prep["b_fu_lfu"] = jnp.concatenate([raw["fu_bias"], raw["lfu_bias"]])
    else:
        prep["w_fu"] = fu_w
        prep["b_fu"] = raw["fu_bias"]
    return prep


# ----------------------------------------------------------------------------
# Plain-JAX reference (unfused, NCHW) used only for a correctness check.
# ----------------------------------------------------------------------------
def _ref_conv1x1(x, w, scale=None, bias=None, relu=False):
    y = jnp.einsum("oc,nchw->nohw", w, x, precision="highest")
    if scale is not None:
        y = y * scale[None, :, None, None]
    if bias is not None:
        y = y + bias[None, :, None, None]
    return jnp.maximum(y, 0.0) if relu else y


def _ref_fourier_unit(w, scale, bias, x):
    n, c, h, wd = x.shape
    ff = jnp.fft.rfft2(x, norm="ortho")
    wf = ff.shape[-1]
    feat = jnp.stack([jnp.real(ff), jnp.imag(ff)], axis=2).reshape(n, 2 * c, h, wf)
    feat = _ref_conv1x1(feat, w, scale, bias, relu=True)
    cout = feat.shape[1] // 2
    feat = feat.reshape(n, cout, 2, h, wf)
    comp = jax.lax.complex(feat[:, :, 0], feat[:, :, 1])
    return jnp.fft.irfft2(comp, s=(h, wd), norm="ortho")


def _ref_forward(raw, x_l, x_g, enable_lfu=True):
    out_xl = _ref_conv1x1(x_l, raw["w_l2l"]) + _ref_conv1x1(x_g, raw["w_g2l"])
    l2g = _ref_conv1x1(x_l, raw["w_l2g"])
    y = _ref_conv1x1(x_g, raw["conv1_w"], raw["conv1_scale"], raw["conv1_bias"], True)
    fu = _ref_fourier_unit(raw["fu_w"], raw["fu_scale"], raw["fu_bias"], y)
    if enable_lfu:
        n, c, h, w = y.shape
        split_no = 2
        ctu = max(1, c // split_no ** 2)
        xs = y[:, :ctu]
        xs = jnp.concatenate(jnp.split(xs, split_no, axis=2), axis=1)
        xs = jnp.concatenate(jnp.split(xs, split_no, axis=3), axis=1)
        if xs.shape[1] < c:
            xs = jnp.concatenate(
                [xs, jnp.zeros((n, c - xs.shape[1]) + xs.shape[2:], xs.dtype)], axis=1)
        elif xs.shape[1] > c:
            xs = xs[:, :c]
        xs = _ref_fourier_unit(raw["lfu_w"], raw["lfu_scale"], raw["lfu_bias"], xs)
        xs = jnp.tile(xs, (1, 1, split_no, split_no))
    else:
        xs = 0.0
    out_xg = l2g + _ref_conv1x1(y + fu + xs, raw["conv2_w"])
    return out_xl, out_xg


if __name__ == "__main__":
    key = jax.random.PRNGKey(0)
    k_x, k_p = jax.random.split(key)

    N, C, H, W = 2, 8, 16, 16
    in_channels = out_channels = C
    ratio_gin = ratio_gout = 0.5

    in_cg = int(in_channels * ratio_gin)
    in_cg = in_cg - in_cg % 4 if in_cg % 4 != 0 else in_cg
    in_cl = in_channels - in_cg
    out_cg = int(out_channels * ratio_gout)
    out_cg = out_cg - out_cg % 4 if out_cg % 4 != 0 else out_cg
    out_cl = out_channels - out_cg

    x = jax.random.normal(k_x, (N, C, H, W), jnp.float32)
    x_l, x_g = x[:, :in_cl], x[:, in_cl:]

    raw = init_raw_params(k_p, in_cl, in_cg, out_cl, out_cg)
    prep = prepare_params(raw, enable_lfu=True)

    out_xl, out_xg = jax.jit(ffc_forward)(prep, x_l, x_g)
    jax.block_until_ready((out_xl, out_xg))

    assert out_xl.shape == (N, out_cl, H, W)
    assert out_xg.shape == (N, out_cg, H, W)

    # Cross-check the fused Pallas path against the straightforward JAX reference.
    ref_xl, ref_xg = _ref_forward(raw, x_l, x_g, enable_lfu=True)
    assert jnp.allclose(out_xl, ref_xl, atol=1e-2, rtol=1e-2)
    assert jnp.allclose(out_xg, ref_xg, atol=1e-2, rtol=1e-2)

    print("KERNEL_OK")
</pallas_src>

<mosaic_0001>
module attributes {stable_mosaic.version = 11 : i64} {
  func.func @kernel(%arg0: i32, %arg1: memref<8x512xf32, #tpu.memory_space<vmem>>, %arg2: memref<10x8xf32, #tpu.memory_space<vmem>>, %arg3: memref<10x1xf32, #tpu.memory_space<vmem>>, %arg4: memref<10x512xf32, #tpu.memory_space<vmem>>) attributes {dimension_semantics = [#tpu.dimension_semantics<arbitrary>], iteration_bounds = array<i64: 1>, scalar_prefetch = 0 : i64, scratch_operands = 0 : i64, tpu.core_type = #tpu.core_type<tc>, window_params = [{pipeline_mode = #tpu.pipeline_mode<synchronous>, transform_indices = @transform_0, window_bounds = array<i64: 8, 512>}, {pipeline_mode = #tpu.pipeline_mode<synchronous>, transform_indices = @transform_1, window_bounds = array<i64: 10, 8>}, {pipeline_mode = #tpu.pipeline_mode<synchronous>, transform_indices = @transform_2, window_bounds = array<i64: 10, 1>}, {pipeline_mode = #tpu.pipeline_mode<synchronous>, transform_indices = @transform_3, window_bounds = array<i64: 10, 512>}]} {
    %c0 = arith.constant 0 : index
    %c0_0 = arith.constant 0 : index
    %0 = vector.load %arg2[%c0, %c0_0] : memref<10x8xf32, #tpu.memory_space<vmem>>, vector<10x8xf32>
    %c0_1 = arith.constant 0 : index
    %c0_2 = arith.constant 0 : index
    %1 = vector.load %arg1[%c0_1, %c0_2] : memref<8x512xf32, #tpu.memory_space<vmem>>, vector<8x512xf32>
    %cst = arith.constant dense<0.000000e+00> : vector<10x512xf32>
    %2 = tpu.matmul %0, %1, %cst {dimension_numbers = #tpu.dot_dimension_numbers<[1], [0], [0], [1], [0, 0, 1, 1], [], []>} : vector<10x8xf32>, vector<8x512xf32>, vector<10x512xf32> -> vector<10x512xf32>
    %c0_3 = arith.constant 0 : index
    %c0_4 = arith.constant 0 : index
    %3 = vector.load %arg3[%c0_3, %c0_4] : memref<10x1xf32, #tpu.memory_space<vmem>>, vector<10x1xf32>
    %4 = vector.broadcast %3 : vector<10x1xf32> to vector<10x512xf32>
    %5 = arith.addf %2, %4 : vector<10x512xf32>
    %6 = tpu.iota {dimensions = array<i32: 0>} : vector<10x512xi32>
    %c8_i32 = arith.constant 8 : i32
    %7 = vector.broadcast %c8_i32 : i32 to vector<10x512xi32>
    %8 = arith.cmpi sge, %6, %7 : vector<10x512xi32>
    %cst_5 = arith.constant 0.000000e+00 : f32
    %9 = vector.broadcast %cst_5 : f32 to vector<10x512xf32>
    %10 = arith.maximumf %5, %9 : vector<10x512xf32>
    %11 = arith.select %8, %10, %5 : vector<10x512xi1>, vector<10x512xf32>
    %c0_6 = arith.constant 0 : index
    %c0_7 = arith.constant 0 : index
    %12 = vector.load %arg4[%c0_6, %c0_7] : memref<10x512xf32, #tpu.memory_space<vmem>>, vector<10x512xf32>
    tpu.vector_store %arg4[%c0_6, %c0_7], %11 {strides = array<i32>} : memref<10x512xf32, #tpu.memory_space<vmem>>, vector<10x512xf32>,
    return
  }
  func.func @transform_0(%arg0: i32) -> (i32, i32) {
    %c0_i32 = arith.constant 0 : i32
    %c0_i32_0 = arith.constant 0 : i32
    %c0_i32_1 = arith.constant 0 : i32
    return %c0_i32, %c0_i32_0 : i32, i32
  }
  func.func @transform_1(%arg0: i32) -> (i32, i32) {
    %c0_i32 = arith.constant 0 : i32
    %c0_i32_0 = arith.constant 0 : i32
    %c0_i32_1 = arith.constant 0 : i32
    return %c0_i32, %c0_i32_0 : i32, i32
  }
  func.func @transform_2(%arg0: i32) -> (i32, i32) {
    %c0_i32 = arith.constant 0 : i32
    %c0_i32_0 = arith.constant 0 : i32
    %c0_i32_1 = arith.constant 0 : i32
    return %c0_i32, %c0_i32_0 : i32, i32
  }
  func.func @transform_3(%arg0: i32) -> (i32, i32) {
    %c0_i32 = arith.constant 0 : i32
    %c0_i32_0 = arith.constant 0 : i32
    %c0_i32_1 = arith.constant 0 : i32
    return %c0_i32, %c0_i32_0 : i32, i32
  }
}

module attributes {stable_mosaic.version = 11 : i64} {
  func.func @kernel(%arg0: i32, %arg1: memref<8x288xf32, #tpu.memory_space<vmem>>, %arg2: memref<8x8xf32, #tpu.memory_space<vmem>>, %arg3: memref<8x1xf32, #tpu.memory_space<vmem>>, %arg4: memref<8x288xf32, #tpu.memory_space<vmem>>) attributes {dimension_semantics = [#tpu.dimension_semantics<arbitrary>], iteration_bounds = array<i64: 1>, scalar_prefetch = 0 : i64, scratch_operands = 0 : i64, tpu.core_type = #tpu.core_type<tc>, window_params = [{pipeline_mode = #tpu.pipeline_mode<synchronous>, transform_indices = @transform_0, window_bounds = array<i64: 8, 288>}, {pipeline_mode = #tpu.pipeline_mode<synchronous>, transform_indices = @transform_1, window_bounds = array<i64: 8, 8>}, {pipeline_mode = #tpu.pipeline_mode<synchronous>, transform_indices = @transform_2, window_bounds = array<i64: 8, 1>}, {pipeline_mode = #tpu.pipeline_mode<synchronous>, transform_indices = @transform_3, window_bounds = array<i64: 8, 288>}]} {
    %c0 = arith.constant 0 : index
    %c0_0 = arith.constant 0 : index
    %0 = vector.load %arg2[%c0, %c0_0] : memref<8x8xf32, #tpu.memory_space<vmem>>, vector<8x8xf32>
    %c0_1 = arith.constant 0 : index
    %c0_2 = arith.constant 0 : index
    %1 = vector.load %arg1[%c0_1, %c0_2] : memref<8x288xf32, #tpu.memory_space<vmem>>, vector<8x288xf32>
    %cst = arith.constant dense<0.000000e+00> : vector<8x288xf32>
    %2 = tpu.matmul %0, %1, %cst {dimension_numbers = #tpu.dot_dimension_numbers<[1], [0], [0], [1], [0, 0, 1, 1], [], []>} : vector<8x8xf32>, vector<8x288xf32>, vector<8x288xf32> -> vector<8x288xf32>
    %c0_3 = arith.constant 0 : index
    %c0_4 = arith.constant 0 : index
    %3 = vector.load %arg3[%c0_3, %c0_4] : memref<8x1xf32, #tpu.memory_space<vmem>>, vector<8x1xf32>
    %4 = vector.broadcast %3 : vector<8x1xf32> to vector<8x288xf32>
    %5 = arith.addf %2, %4 : vector<8x288xf32>
    %cst_5 = arith.constant 0.000000e+00 : f32
    %6 = vector.broadcast %cst_5 : f32 to vector<8x288xf32>
    %7 = arith.maximumf %5, %6 : vector<8x288xf32>
    %c0_6 = arith.constant 0 : index
    %c0_7 = arith.constant 0 : index
    %8 = vector.load %arg4[%c0_6, %c0_7] : memref<8x288xf32, #tpu.memory_space<vmem>>, vector<8x288xf32>
    tpu.vector_store %arg4[%c0_6, %c0_7], %7 {strides = array<i32>} : memref<8x288xf32, #tpu.memory_space<vmem>>, vector<8x288xf32>,
    return
  }
  func.func @transform_0(%arg0: i32) -> (i32, i32) {
    %c0_i32 = arith.constant 0 : i32
    %c0_i32_0 = arith.constant 0 : i32
    %c0_i32_1 = arith.constant 0 : i32
    return %c0_i32, %c0_i32_0 : i32, i32
  }
  func.func @transform_1(%arg0: i32) -> (i32, i32) {
    %c0_i32 = arith.constant 0 : i32
    %c0_i32_0 = arith.constant 0 : i32
    %c0_i32_1 = arith.constant 0 : i32
    return %c0_i32, %c0_i32_0 : i32, i32
  }
  func.func @transform_2(%arg0: i32) -> (i32, i32) {
    %c0_i32 = arith.constant 0 : i32
    %c0_i32_0 = arith.constant 0 : i32
    %c0_i32_1 = arith.constant 0 : i32
    return %c0_i32, %c0_i32_0 : i32, i32
  }
  func.func @transform_3(%arg0: i32) -> (i32, i32) {
    %c0_i32 = arith.constant 0 : i32
    %c0_i32_0 = arith.constant 0 : i32
    %c0_i32_1 = arith.constant 0 : i32
    return %c0_i32, %c0_i32_0 : i32, i32
  }
}

module attributes {stable_mosaic.version = 11 : i64} {
  func.func @kernel(%arg0: i32, %arg1: memref<2x512xf32, #tpu.memory_space<vmem>>, %arg2: memref<4x2xf32, #tpu.memory_space<vmem>>, %arg3: memref<4x512xf32, #tpu.memory_space<vmem>>, %arg4: memref<4x512xf32, #tpu.memory_space<vmem>>) attributes {dimension_semantics = [#tpu.dimension_semantics<arbitrary>], iteration_bounds = array<i64: 1>, scalar_prefetch = 0 : i64, scratch_operands = 0 : i64, tpu.core_type = #tpu.core_type<tc>, window_params = [{pipeline_mode = #tpu.pipeline_mode<synchronous>, transform_indices = @transform_0, window_bounds = array<i64: 2, 512>}, {pipeline_mode = #tpu.pipeline_mode<synchronous>, transform_indices = @transform_1, window_bounds = array<i64: 4, 2>}, {pipeline_mode = #tpu.pipeline_mode<synchronous>, transform_indices = @transform_2, window_bounds = array<i64: 4, 512>}, {pipeline_mode = #tpu.pipeline_mode<synchronous>, transform_indices = @transform_3, window_bounds = array<i64: 4, 512>}]} {
    %c0 = arith.constant 0 : index
    %c0_0 = arith.constant 0 : index
    %0 = vector.load %arg2[%c0, %c0_0] : memref<4x2xf32, #tpu.memory_space<vmem>>, vector<4x2xf32>
    %c0_1 = arith.constant 0 : index
    %c0_2 = arith.constant 0 : index
    %1 = vector.load %arg1[%c0_1, %c0_2] : memref<2x512xf32, #tpu.memory_space<vmem>>, vector<2x512xf32>
    %cst = arith.constant dense<0.000000e+00> : vector<4x512xf32>
    %2 = tpu.matmul %0, %1, %cst {dimension_numbers = #tpu.dot_dimension_numbers<[1], [0], [0], [1], [0, 0, 1, 1], [], []>} : vector<4x2xf32>, vector<2x512xf32>, vector<4x512xf32> -> vector<4x512xf32>
    %c0_3 = arith.constant 0 : index
    %c0_4 = arith.constant 0 : index
    %3 = vector.load %arg3[%c0_3, %c0_4] : memref<4x512xf32, #tpu.memory_space<vmem>>, vector<4x512xf32>
    %4 = arith.addf %2, %3 : vector<4x512xf32>
    %c0_5 = arith.constant 0 : index
    %c0_6 = arith.constant 0 : index
    %5 = vector.load %arg4[%c0_5, %c0_6] : memref<4x512xf32, #tpu.memory_space<vmem>>, vector<4x512xf32>
    tpu.vector_store %arg4[%c0_5, %c0_6], %4 {strides = array<i32>} : memref<4x512xf32, #tpu.memory_space<vmem>>, vector<4x512xf32>,
    return
  }
  func.func @transform_0(%arg0: i32) -> (i32, i32) {
    %c0_i32 = arith.constant 0 : i32
    %c0_i32_0 = arith.constant 0 : i32
    %c0_i32_1 = arith.constant 0 : i32
    return %c0_i32, %c0_i32_0 : i32, i32
  }
  func.func @transform_1(%arg0: i32) -> (i32, i32) {
    %c0_i32 = arith.constant 0 : i32
    %c0_i32_0 = arith.constant 0 : i32
    %c0_i32_1 = arith.constant 0 : i32
    return %c0_i32, %c0_i32_0 : i32, i32
  }
  func.func @transform_2(%arg0: i32) -> (i32, i32) {
    %c0_i32 = arith.constant 0 : i32
    %c0_i32_0 = arith.constant 0 : i32
    %c0_i32_1 = arith.constant 0 : i32
    return %c0_i32, %c0_i32_0 : i32, i32
  }
  func.func @transform_3(%arg0: i32) -> (i32, i32) {
    %c0_i32 = arith.constant 0 : i32
    %c0_i32_0 = arith.constant 0 : i32
    %c0_i32_1 = arith.constant 0 : i32
    return %c0_i32, %c0_i32_0 : i32, i32
  }
}

</mosaic_0001>

<llo_original>
// kernel: ffc_forward.3
$region0: #{ffc_forward.3}
  #allocation0 [shape = 'u32[]', space=smem, size = 0x4, offset = 0x4, fixed_abs, tag = 'smem constant byte address 0x4 - core index']
  #allocation1 [shape = 'u32[144,128]{1,0:T(1,128)}', space=vmem, size = 0x12000, scoped, tag = 'internal scratch']
  %s0 = inlined_call_operand.vmem [shape: f32[8,512], index: 0, kind: input, shape index: {}]
  %s1 = inlined_call_operand.vmem [shape: f32[10,8], index: 1, kind: input, shape index: {}]
  %s2 = inlined_call_operand.vmem [shape: f32[10,1], index: 2, kind: input, shape index: {}]
  %s3 = inlined_call_operand.vmem [shape: f32[10,512], index: 3, kind: output, shape index: {}]
  %s4 = sld [smem:[#allocation0]]
  $region22: #{ffc_forward.3} parent=0
    _
  %s6 = ssub.s32 1, %s4
  %s7 = scalar_select 0, %s6, %s4
  // Predicated region
  $region2: #{ffc_forward.3} parent=0 // pred_check
    _
  $region3: #{ffc_forward.3} parent=0 // pred_check_branch
    %9 = sbr.rel (0) target = $region5
  $region4: #{ffc_forward.3} parent=0 // pred_region
    _
  $region5: #{ffc_forward.3} parent=0 // pred_fallthru
    _
  // Predicated region
  $region6: #{ffc_forward.3} parent=0 // pred_check
    _
  $region7: #{ffc_forward.3} parent=0 // pred_check_branch
    %11 = sbr.rel (0) target = $region9
  $region8: #{ffc_forward.3} parent=0 // pred_region
    _
  $region9: #{ffc_forward.3} parent=0 // pred_fallthru
    _
  // Predicated region
  $region10: #{ffc_forward.3} parent=0 // pred_check
    _
  $region11: #{ffc_forward.3} parent=0 // pred_check_branch
    %13 = sbr.rel (0) target = $region13
  $region12: #{ffc_forward.3} parent=0 // pred_region
    _
  $region13: #{ffc_forward.3} parent=0 // pred_fallthru
    _
  %v14 = vld [vmem:[%s1] sm:$0xff]
  %v15 = vld [vmem:[%s1 + $0x8] sm:$0x3]
  %v16 = vld [vmem:[%s0] sm:$0xff]
  %v17 = vld [vmem:[%s0 + $0x8] sm:$0xff]
  %v18 = vld [vmem:[%s0 + $0x10] sm:$0xff]
  %v19 = vld [vmem:[%s0 + $0x18] sm:$0xff]
  %v20 = vld [vmem:[%s2] sm:$0xff]
  %v21 = vld [vmem:[%s2 + $0x8] sm:$0x3]
  %23 = vset.pattern.permute.xlu0 0
  %24 = vperm.xlu0 %23, %v20
  %v25 = vpop.permute.xlu0 %24
  %28 = vset.pattern.permute.xlu0 0
  %29 = vperm.xlu0 %28, %v21
  %v30 = vpop.permute.xlu0 %29
  %vm32 = vcmask 64512
  %v34 = vsel %vm32, %v14, 0
  %v37 = vsel %vm32, %v15, 0
  %39 = vmatprep.subr.mxu0 0.0
  %40 = vmatpush1.msra.mxu0 0.0
  %41 = vmatprep.subr.mxu0 0.0
  %42 = vmatpush1.msra.mxu0 0.0
  %43 = vmatprep.subr.mxu0 0.0
  %44 = vmatpush1.msra.mxu0 0.0
  %45 = vmatprep.subr.mxu0 0.0
  %46 = vmatpush1.msra.mxu0 0.0
  %47 = vmatprep.subr.mxu0 0.0
  %48 = vmatpush1.msra.mxu0 0.0
  %49 = vmatprep.subr.mxu0 0.0
  %50 = vmatpush1.msra.mxu0 0.0
  %51 = vmatprep.subr.mxu0 0.0
  %52 = vmatpush1.msra.mxu0 0.0
  %53 = vmatprep.subr.mxu0 0.0
  %54 = vmatpush1.msra.mxu0 0.0
  %55 = vmatprep.subr.mxu0 0.0
  %56 = vmatpush1.msra.mxu0 0.0
  %57 = vmatprep.subr.mxu0 0.0
  %58 = vmatpush1.msra.mxu0 0.0
  %59 = vmatprep.subr.mxu0 0.0
  %60 = vmatpush1.msra.mxu0 0.0
  %61 = vmatprep.subr.mxu0 0.0
  %62 = vmatpush1.msra.mxu0 0.0
  %63 = vmatprep.subr.mxu0 0.0
  %64 = vmatpush1.msra.mxu0 0.0
  %65 = vmatprep.subr.mxu0 0.0
  %66 = vmatpush1.msra.mxu0 0.0
  %67 = vmatprep.subr.mxu0 0.0
  %68 = vmatpush1.msra.mxu0 0.0
  %69 = vmatprep.subr.mxu0 %v17
  %70 = vmatpush1.msra.mxu0 %v16
  %71 = vmatprep.subr.mxu0 0.0
  %72 = vmatpush2.msra.mxu0 0.0
  %73 = vmatprep.subr.mxu0 0.0
  %74 = vmatpush2.msra.mxu0 0.0
  %75 = vmatprep.subr.mxu0 0.0
  %76 = vmatpush2.msra.mxu0 0.0
  %77 = vmatprep.subr.mxu0 0.0
  %78 = vmatpush2.msra.mxu0 0.0
  %79 = vmatprep.subr.mxu0 0.0
  %80 = vmatpush2.msra.mxu0 0.0
  %81 = vmatprep.subr.mxu0 0.0
  %82 = vmatpush2.msra.mxu0 0.0
  %83 = vmatprep.subr.mxu0 0.0
  %84 = vmatpush2.msra.mxu0 0.0
  %85 = vmatprep.subr.mxu0 0.0
  %86 = vmatpush2.msra.mxu0 0.0
  %87 = vmatprep.subr.mxu0 0.0
  %88 = vmatpush2.msra.mxu0 0.0
  %89 = vmatprep.subr.mxu0 0.0
  %90 = vmatpush2.msra.mxu0 0.0
  %91 = vmatprep.subr.mxu0 0.0
  %92 = vmatpush2.msra.mxu0 0.0
  %93 = vmatprep.subr.mxu0 0.0
  %94 = vmatpush2.msra.mxu0 0.0
  %95 = vmatprep.subr.mxu0 0.0
  %96 = vmatpush2.msra.mxu0 0.0
  %97 = vmatprep.subr.mxu0 0.0
  %98 = vmatpush2.msra.mxu0 0.0
  %99 = vmatprep.subr.mxu0 0.0
  %100 = vmatpush2.msra.mxu0 0.0
  %101 = vmatprep.subr.mxu0 0.0
  %102 = vmatpush2.msra.mxu0 0.0
  %103 = vmatprep.mubr.f32.mxu0 0.0
  %104 = vmatmul.mubr.f32.gmra.mxu0 %v34
  %v105 = vpop.f32.mrf.mxu0
  %v106 = vadd.f32 %v25, %v105
  %v107 = vpop.f32.mrf.mxu0
  %v108 = vadd.f32 %v25, %v107
  %109 = vmatprep.mubr.f32.mxu0 0.0
  %110 = vmatmul.mubr.f32.gmra.mxu0 %v37
  %v111 = vpop.f32.mrf.mxu0
  %v112 = vadd.f32 %v30, %v111
  %v113 = vpop.f32.mrf.mxu0
  %v114 = vadd.f32 %v30, %v113
  %115 = vdwg.mxu0
  %116 = vmatprep.subr.mxu0 0.0
  %117 = vmatpush1.msra.mxu0 0.0
  %118 = vmatprep.subr.mxu0 0.0
  %119 = vmatpush1.msra.mxu0 0.0
  %120 = vmatprep.subr.mxu0 0.0
  %121 = vmatpush1.msra.mxu0 0.0
  %122 = vmatprep.subr.mxu0 0.0
  %123 = vmatpush1.msra.mxu0 0.0
  %124 = vmatprep.subr.mxu0 0.0
  %125 = vmatpush1.msra.mxu0 0.0
  %126 = vmatprep.subr.mxu0 0.0
  %127 = vmatpush1.msra.mxu0 0.0
  %128 = vmatprep.subr.mxu0 0.0
  %129 = vmatpush1.msra.mxu0 0.0
  %130 = vmatprep.subr.mxu0 0.0
  %131 = vmatpush1.msra.mxu0 0.0
  %132 = vmatprep.subr.mxu0 0.0
  %133 = vmatpush1.msra.mxu0 0.0
  %134 = vmatprep.subr.mxu0 0.0
  %135 = vmatpush1.msra.mxu0 0.0
  %136 = vmatprep.subr.mxu0 0.0
  %137 = vmatpush1.msra.mxu0 0.0
  %138 = vmatprep.subr.mxu0 0.0
  %139 = vmatpush1.msra.mxu0 0.0
  %140 = vmatprep.subr.mxu0 0.0
  %141 = vmatpush1.msra.mxu0 0.0
  %142 = vmatprep.subr.mxu0 0.0
  %143 = vmatpush1.msra.mxu0 0.0
  %144 = vmatprep.subr.mxu0 0.0
  %145 = vmatpush1.msra.mxu0 0.0
  %146 = vmatprep.subr.mxu0 %v19
  %147 = vmatpush1.msra.mxu0 %v18
  %148 = vmatprep.subr.mxu0 0.0
  %149 = vmatpush2.msra.mxu0 0.0
  %150 = vmatprep.subr.mxu0 0.0
  %151 = vmatpush2.msra.mxu0 0.0
  %152 = vmatprep.subr.mxu0 0.0
  %153 = vmatpush2.msra.mxu0 0.0
  %154 = vmatprep.subr.mxu0 0.0
  %155 = vmatpush2.msra.mxu0 0.0
  %156 = vmatprep.subr.mxu0 0.0
  %157 = vmatpush2.msra.mxu0 0.0
  %158 = vmatprep.subr.mxu0 0.0
  %159 = vmatpush2.msra.mxu0 0.0
  %160 = vmatprep.subr.mxu0 0.0
  %161 = vmatpush2.msra.mxu0 0.0
  %162 = vmatprep.subr.mxu0 0.0
  %163 = vmatpush2.msra.mxu0 0.0
  %164 = vmatprep.subr.mxu0 0.0
  %165 = vmatpush2.msra.mxu0 0.0
  %166 = vmatprep.subr.mxu0 0.0
  %167 = vmatpush2.msra.mxu0 0.0
  %168 = vmatprep.subr.mxu0 0.0
  %169 = vmatpush2.msra.mxu0 0.0
  %170 = vmatprep.subr.mxu0 0.0
  %171 = vmatpush2.msra.mxu0 0.0
  %172 = vmatprep.subr.mxu0 0.0
  %173 = vmatpush2.msra.mxu0 0.0
  %174 = vmatprep.subr.mxu0 0.0
  %175 = vmatpush2.msra.mxu0 0.0
  %176 = vmatprep.subr.mxu0 0.0
  %177 = vmatpush2.msra.mxu0 0.0
  %178 = vmatprep.subr.mxu0 0.0
  %179 = vmatpush2.msra.mxu0 0.0
  %180 = vmatprep.mubr.f32.mxu0 0.0
  %181 = vmatmul.mubr.f32.gmra.mxu0 %v34
  %v182 = vpop.f32.mrf.mxu0
  %v183 = vadd.f32 %v25, %v182
  %v184 = vpop.f32.mrf.mxu0
  %v185 = vadd.f32 %v25, %v184
  %186 = vmatprep.mubr.f32.mxu0 0.0
  %187 = vmatmul.mubr.f32.gmra.mxu0 %v37
  %v188 = vpop.f32.mrf.mxu0
  %v189 = vadd.f32 %v30, %v188
  %v190 = vpop.f32.mrf.mxu0
  %v191 = vadd.f32 %v30, %v190
  %192 = vdwg.mxu0
  %v193 = vlaneseq
  %v194 = vshrl.u32 %v193, 7
  %v195 = vadd.s32 %v194, 8
  %vm196 = vcmp.ge.s32.totalorder %v194, 8
  %vm197 = vcmp.ge.s32.totalorder %v195, 8
  %v198 = vmax.f32 %v106, 0.0
  %v199 = vmax.f32 %v108, 0.0
  %v200 = vmax.f32 %v183, 0.0
  %v201 = vmax.f32 %v185, 0.0
  %v202 = vmax.f32 %v112, 0.0
  %v203 = vmax.f32 %v114, 0.0
  %v204 = vmax.f32 %v189, 0.0
  %v205 = vmax.f32 %v191, 0.0
  %v206 = vsel %vm196, %v198, %v106
  %v207 = vsel %vm196, %v199, %v108
  %v208 = vsel %vm196, %v200, %v183
  %v209 = vsel %vm196, %v201, %v185
  %v210 = vsel %vm197, %v202, %v112
  %v211 = vsel %vm197, %v203, %v114
  %v212 = vsel %vm197, %v204, %v189
  %v213 = vsel %vm197, %v205, %v191
  %214 = vst [vmem:[%s3] sm:$0xff] %v206
  %215 = vst [vmem:[%s3 + $0x8] sm:$0xff] %v207
  %216 = vst [vmem:[%s3 + $0x10] sm:$0xff] %v208
  %217 = vst [vmem:[%s3 + $0x18] sm:$0xff] %v209
  %218 = vst [vmem:[%s3 + $0x20] sm:$0x3] %v210
  %219 = vst [vmem:[%s3 + $0x28] sm:$0x3] %v211
  %220 = vst [vmem:[%s3 + $0x30] sm:$0x3] %v212
  %221 = vst [vmem:[%s3 + $0x38] sm:$0x3] %v213
  // Predicated region
  $region14: #{ffc_forward.3} parent=0 // pred_check
    _
  $region15: #{ffc_forward.3} parent=0 // pred_check_branch
    %223 = sbr.rel (0) target = $region17
  $region16: #{ffc_forward.3} parent=0 // pred_region
    _
  $region17: #{ffc_forward.3} parent=0 // pred_fallthru
    _
  // Predicated region
  $region18: #{ffc_forward.3} parent=0 // pred_check
    _
  $region19: #{ffc_forward.3} parent=0 // pred_check_branch
    %225 = sbr.rel (0) target = $region21
  $region20: #{ffc_forward.3} parent=0 // pred_region
    _
  $region21: #{ffc_forward.3} parent=0 // pred_fallthru
    _

// kernel: reverse.0
$region0: #{reverse.0}
  %s0 = inlined_call_operand.vmem [shape: f32[2,2,16,7], index: 0, kind: input, shape index: {}]
  %s1 = inlined_call_operand.vmem [shape: f32[2,2,16,7], index: 1, kind: output, shape index: {}]
  $region1: #{reverse.0} parent=0
    #allocation0 [shape = 'u8[32768]{0}', space=vmem, size = 0x8000, scoped, tag = 'operand span for operand 0']
    #allocation1 [shape = 'u8[16384]{0}', space=vmem, size = 0x4000, scoped, tag = 'operand span for operand 1']
    %s2 = scalar_lea.vmem [#allocation0], 8
    // Predicated region
    $region2: #{reverse.0} parent=1 // pred_check
      _
    $region3: #{reverse.0} parent=1 // pred_check_branch
      %4 = sbr.rel (0) target = $region5
    $region4: #{reverse.0} parent=1 // pred_region
      // Predicated region
      $region6: #{reverse.0} parent=4 // pred_check
        _
      $region7: #{reverse.0} parent=4 // pred_check_branch
        %6 = sbr.rel (0) target = $region9
      $region8: #{reverse.0} parent=4 // pred_region
        // Predicated region
        $region21: #{reverse.0} parent=8 // pred_check
          _
        $region22: #{reverse.0} parent=8 // pred_check_branch
          %28 = sbr.rel (0) target = $region24
        $region23: #{reverse.0} parent=8 // pred_region
          loop: start=0, step=1, limit=1
          $region25: #{reverse.0} parent=23 // loop_pre_header
            _
          $region26: #{reverse.0} parent=23 // loop_header
            %s30 = sphi 0, %s34
            %p31 = scmp.ge.s32.totalorder %s30, 1
            %s35 = sphi %s0, %s0
            %s36 = sphi %s2, %s2
          $region27: #{reverse.0} parent=23 // loop_header_branch
            %33 = sbr.rel (%p31) target = $region31
          $region28: #{reverse.0} parent=23 // loop_body
            %v37 = vld [vmem:[%s35] sm:$0xff]
            %38 = vst [vmem:[%s36] sm:$0xff] %v37
            %v39 = vld [vmem:[%s35 + $0x8] sm:$0xff]
            %40 = vst [vmem:[%s36 + $0x10] sm:$0xff] %v39
            %v41 = vld [vmem:[%s35 + $0x10] sm:$0xff]
            %42 = vst [vmem:[%s36 + $0x20] sm:$0xff] %v41
            %v43 = vld [vmem:[%s35 + $0x18] sm:$0xff]
            %44 = vst [vmem:[%s36 + $0x30] sm:$0xff] %v43
          $region29: #{reverse.0} parent=23 // loop_footer
            %s34 = sadd.s32 1, %s30
          $region30: #{reverse.0} parent=23 // loop_footer_branch
            %29 = sbr.rel target = $region26
          $region31: #{reverse.0} parent=23 // loop_exit
            _
        $region24: #{reverse.0} parent=8 // pred_fallthru
          _
        // Predicated region
        $region32: #{reverse.0} parent=8 // pred_check
          _
        $region33: #{reverse.0} parent=8 // pred_check_branch
          %46 = sbr.rel target = $region35
        $region34: #{reverse.0} parent=8 // pred_region
          _
        $region35: #{reverse.0} parent=8 // pred_fallthru
          _
      $region9: #{reverse.0} parent=4 // pred_fallthru
        _
      // Predicated region
      $region10: #{reverse.0} parent=4 // pred_check
        _
      $region11: #{reverse.0} parent=4 // pred_check_branch
        %8 = sbr.rel target = $region13
      $region12: #{reverse.0} parent=4 // pred_region
        %s10 = ssub.s32 256, 1
        loop: start=0, step=1, limit=1
        $region14: #{reverse.0} parent=12 // loop_pre_header
          _
        $region15: #{reverse.0} parent=12 // loop_header
          %s12 = sphi 0, %s16
          %p13 = scmp.ge.s32.totalorder %s12, 1
          %s17 = sphi %s0, %s0
          %s18 = sphi %s2, %s2
        $region16: #{reverse.0} parent=12 // loop_header_branch
          %15 = sbr.rel (%p13) target = $region20
        $region17: #{reverse.0} parent=12 // loop_body
          %v19 = vld [vmem:[%s17] sm:%s10]
          %20 = vst [vmem:[%s18] sm:%s10] %v19
          %v21 = vld [vmem:[%s17 + $0x8] sm:%s10]
          %22 = vst [vmem:[%s18 + $0x10] sm:%s10] %v21
          %v23 = vld [vmem:[%s17 + $0x10] sm:%s10]
          %24 = vst [vmem:[%s18 + $0x20] sm:%s10] %v23
          %v25 = vld [vmem:[%s17 + $0x18] sm:%s10]
          %26 = vst [vmem:[%s18 + $0x30] sm:%s10] %v25
        $region18: #{reverse.0} parent=12 // loop_footer
          %s16 = sadd.s32 1, %s12
        $region19: #{reverse.0} parent=12 // loop_footer_branch
          %11 = sbr.rel target = $region15
        $region20: #{reverse.0} parent=12 // loop_exit
          _
      $region13: #{reverse.0} parent=4 // pred_fallthru
        _
    $region5: #{reverse.0} parent=1 // pred_fallthru
      _
    %47 = vnop
    %s48 = scalar_lea.vmem [#allocation0], 7
    %v49 = vld [vmem:[%s48] ss:$-1 sm:$0xff]
    %v50 = vrot.slane %v49, 1
    %51 = vst [vmem:[#allocation1] sm:$0xff] %v50
    %s52 = scalar_lea.vmem [#allocation0], 8
    %s53 = scalar_lea.vmem %s52, 7 [#allocation0]
    %v54 = vld [vmem:[%s53] ss:$-1 sm:$0xff]
    %v55 = vrot.slane %v54, 1
    %v56 = vlaneseq
    %v57 = vshrl.u32 %v56, 7
    %vm58 = vcmp.lt.s32.totalorder %v57, 7
    %59 = vst.msk [vmem:[#allocation1] sm:$0xff] %vm58, %v55
    %s60 = scalar_lea.vmem [#allocation1], 8
    %s61 = scalar_lea.vmem [#allocation0], 16
    %s62 = scalar_lea.vmem %s61, 7 [#allocation0]
    %v63 = vld [vmem:[%s62] ss:$-1 sm:$0xff]
    %v64 = vrot.slane %v63, 1
    %65 = vst [vmem:[%s60] sm:$0xff] %v64
    %s66 = scalar_lea.vmem %s61, 8 [#allocation0]
    %s67 = scalar_lea.vmem %s66, 7 [#allocation0]
    %v68 = vld [vmem:[%s67] ss:$-1 sm:$0xff]
    %v69 = vrot.slane %v68, 1
    %v70 = vlaneseq
    %v71 = vshrl.u32 %v70, 7
    %vm72 = vcmp.lt.s32.totalorder %v71, 7
    %73 = vst.msk [vmem:[%s60] sm:$0xff] %vm72, %v69
    %s74 = scalar_lea.vmem [#allocation1], 16
    %s75 = scalar_lea.vmem [#allocation0], 32
    %s76 = scalar_lea.vmem %s75, 7 [#allocation0]
    %v77 = vld [vmem:[%s76] ss:$-1 sm:$0xff]
    %v78 = vrot.slane %v77, 1
    %79 = vst [vmem:[%s74] sm:$0xff] %v78
    %s80 = scalar_lea.vmem %s75, 8 [#allocation0]
    %s81 = scalar_lea.vmem %s80, 7 [#allocation0]
    %v82 = vld [vmem:[%s81] ss:$-1 sm:$0xff]
    %v83 = vrot.slane %v82, 1
    %v84 = vlaneseq
    %v85 = vshrl.u32 %v84, 7
    %vm86 = vcmp.lt.s32.totalorder %v85, 7
    %87 = vst.msk [vmem:[%s74] sm:$0xff] %vm86, %v83
    %s88 = scalar_lea.vmem [#allocation1], 24
    %s89 = scalar_lea.vmem [#allocation0], 48
    %s90 = scalar_lea.vmem %s89, 7 [#allocation0]
    %v91 = vld [vmem:[%s90] ss:$-1 sm:$0xff]
    %v92 = vrot.slane %v91, 1
    %93 = vst [vmem:[%s88] sm:$0xff] %v92
    %s94 = scalar_lea.vmem %s89, 8 [#allocation0]
    %s95 = scalar_lea.vmem %s94, 7 [#allocation0]
    %v96 = vld [vmem:[%s95] ss:$-1 sm:$0xff]
    %v97 = vrot.slane %v96, 1
    %v98 = vlaneseq
    %v99 = vshrl.u32 %v98, 7
    %vm100 = vcmp.lt.s32.totalorder %v99, 7
    %101 = vst.msk [vmem:[%s88] sm:$0xff] %vm100, %v97
    // Predicated region
    $region36: #{reverse.0} parent=1 // pred_check
      _
    $region37: #{reverse.0} parent=1 // pred_check_branch
      %103 = sbr.rel (0) target = $region39
    $region38: #{reverse.0} parent=1 // pred_region
      // Predicated region
      $region40: #{reverse.0} parent=38 // pred_check
        _
      $region41: #{reverse.0} parent=38 // pred_check_branch
        %105 = sbr.rel (0) target = $region43
      $region42: #{reverse.0} parent=38 // pred_region
        // Predicated region
        $region55: #{reverse.0} parent=42 // pred_check
          _
        $region56: #{reverse.0} parent=42 // pred_check_branch
          %127 = sbr.rel (0) target = $region58
        $region57: #{reverse.0} parent=42 // pred_region
          loop: start=0, step=1, limit=1
          $region59: #{reverse.0} parent=57 // loop_pre_header
            _
          $region60: #{reverse.0} parent=57 // loop_header
            %s129 = sphi 0, %s133
            %p130 = scmp.ge.s32.totalorder %s129, 1
            %s134 = sphi [#allocation1], [#allocation1]
            %s135 = sphi %s1, %s1
          $region61: #{reverse.0} parent=57 // loop_header_branch
            %132 = sbr.rel (%p130) target = $region65
          $region62: #{reverse.0} parent=57 // loop_body
            %v136 = vld [vmem:[%s134] sm:$0xff]
            %137 = vst [vmem:[%s135] sm:$0xff] %v136
            %v138 = vld [vmem:[%s134 + $0x8] sm:$0xff]
            %139 = vst [vmem:[%s135 + $0x8] sm:$0xff] %v138
            %v140 = vld [vmem:[%s134 + $0x10] sm:$0xff]
            %141 = vst [vmem:[%s135 + $0x10] sm:$0xff] %v140
            %v142 = vld [vmem:[%s134 + $0x18] sm:$0xff]
            %143 = vst [vmem:[%s135 + $0x18] sm:$0xff] %v142
          $region63: #{reverse.0} parent=57 // loop_footer
            %s133 = sadd.s32 1, %s129
          $region64: #{reverse.0} parent=57 // loop_footer_branch
            %128 = sbr.rel target = $region60
          $region65: #{reverse.0} parent=57 // loop_exit
            _
        $region58: #{reverse.0} parent=42 // pred_fallthru
          _
        // Predicated region
        $region66: #{reverse.0} parent=42 // pred_check
          _
        $region67: #{reverse.0} parent=42 // pred_check_branch
          %145 = sbr.rel target = $region69
        $region68: #{reverse.0} parent=42 // pred_region
          _
        $region69: #{reverse.0} parent=42 // pred_fallthru
          _
      $region43: #{reverse.0} parent=38 // pred_fallthru
        _
      // Predicated region
      $region44: #{reverse.0} parent=38 // pred_check
        _
      $region45: #{reverse.0} parent=38 // pred_check_branch
        %107 = sbr.rel target = $region47
      $region46: #{reverse.0} parent=38 // pred_region
        %s109 = ssub.s32 256, 1
        loop: start=0, step=1, limit=1
        $region48: #{reverse.0} parent=46 // loop_pre_header
          _
        $region49: #{reverse.0} parent=46 // loop_header
          %s111 = sphi 0, %s115
          %p112 = scmp.ge.s32.totalorder %s111, 1
          %s116 = sphi [#allocation1], [#allocation1]
          %s117 = sphi %s1, %s1
        $region50: #{reverse.0} parent=46 // loop_header_branch
          %114 = sbr.rel (%p112) target = $region54
        $region51: #{reverse.0} parent=46 // loop_body
          %v118 = vld [vmem:[%s116] sm:%s109]
          %119 = vst [vmem:[%s117] sm:%s109] %v118
          %v120 = vld [vmem:[%s116 + $0x8] sm:%s109]
          %121 = vst [vmem:[%s117 + $0x8] sm:%s109] %v120
          %v122 = vld [vmem:[%s116 + $0x10] sm:%s109]
          %123 = vst [vmem:[%s117 + $0x10] sm:%s109] %v122
          %v124 = vld [vmem:[%s116 + $0x18] sm:%s109]
          %125 = vst [vmem:[%s117 + $0x18] sm:%s109] %v124
        $region52: #{reverse.0} parent=46 // loop_footer
          %s115 = sadd.s32 1, %s111
        $region53: #{reverse.0} parent=46 // loop_footer_branch
          %110 = sbr.rel target = $region49
        $region54: #{reverse.0} parent=46 // loop_exit
          _
      $region47: #{reverse.0} parent=38 // pred_fallthru
        _
    $region39: #{reverse.0} parent=1 // pred_fallthru
      _
    %146 = vnop

// kernel: ffc_forward.4
$region0: #{ffc_forward.4}
  #allocation0 [shape = 'u32[]', space=smem, size = 0x4, offset = 0x4, fixed_abs, tag = 'smem constant byte address 0x4 - core index']
  #allocation1 [shape = 'u32[144,128]{1,0:T(1,128)}', space=vmem, size = 0x12000, scoped, tag = 'internal scratch']
  %s0 = inlined_call_operand.vmem [shape: f32[8,288], index: 0, kind: input, shape index: {}]
  %s1 = inlined_call_operand.vmem [shape: f32[8,8], index: 1, kind: input, shape index: {}]
  %s2 = inlined_call_operand.vmem [shape: f32[8,1], index: 2, kind: input, shape index: {}]
  %s3 = inlined_call_operand.vmem [shape: f32[8,288], index: 3, kind: output, shape index: {}]
  %s4 = sld [smem:[#allocation0]]
  $region22: #{ffc_forward.4} parent=0
    _
  %s6 = ssub.s32 1, %s4
  %s7 = scalar_select 0, %s6, %s4
  // Predicated region
  $region2: #{ffc_forward.4} parent=0 // pred_check
    _
  $region3: #{ffc_forward.4} parent=0 // pred_check_branch
    %9 = sbr.rel (0) target = $region5
  $region4: #{ffc_forward.4} parent=0 // pred_region
    _
  $region5: #{ffc_forward.4} parent=0 // pred_fallthru
    _
  // Predicated region
  $region6: #{ffc_forward.4} parent=0 // pred_check
    _
  $region7: #{ffc_forward.4} parent=0 // pred_check_branch
    %11 = sbr.rel (0) target = $region9
  $region8: #{ffc_forward.4} parent=0 // pred_region
    _
  $region9: #{ffc_forward.4} parent=0 // pred_fallthru
    _
  // Predicated region
  $region10: #{ffc_forward.4} parent=0 // pred_check
    _
  $region11: #{ffc_forward.4} parent=0 // pred_check_branch
    %13 = sbr.rel (0) target = $region13
  $region12: #{ffc_forward.4} parent=0 // pred_region
    _
  $region13: #{ffc_forward.4} parent=0 // pred_fallthru
    _
  %v14 = vld [vmem:[%s1] sm:$0xff]
  %v15 = vld [vmem:[%s0] sm:$0xff]
  %v16 = vld [vmem:[%s0 + $0x8] sm:$0xff]
  %v17 = vld [vmem:[%s0 + $0x10] sm:$0xff]
  %v18 = vld [vmem:[%s2] sm:$0xff]
  %20 = vset.pattern.permute.xlu0 0
  %21 = vperm.xlu0 %20, %v18
  %v22 = vpop.permute.xlu0 %21
  %vm24 = vcmask 64512
  %v26 = vsel %vm24, %v14, 0
  %28 = vmatprep.subr.mxu0 0.0
  %29 = vmatpush1.msra.mxu0 0.0
  %30 = vmatprep.subr.mxu0 0.0
  %31 = vmatpush1.msra.mxu0 0.0
  %32 = vmatprep.subr.mxu0 0.0
  %33 = vmatpush1.msra.mxu0 0.0
  %34 = vmatprep.subr.mxu0 0.0
  %35 = vmatpush1.msra.mxu0 0.0
  %36 = vmatprep.subr.mxu0 0.0
  %37 = vmatpush1.msra.mxu0 0.0
  %38 = vmatprep.subr.mxu0 0.0
  %39 = vmatpush1.msra.mxu0 0.0
  %40 = vmatprep.subr.mxu0 0.0
  %41 = vmatpush1.msra.mxu0 0.0
  %42 = vmatprep.subr.mxu0 0.0
  %43 = vmatpush1.msra.mxu0 0.0
  %44 = vmatprep.subr.mxu0 0.0
  %45 = vmatpush1.msra.mxu0 0.0
  %46 = vmatprep.subr.mxu0 0.0
  %47 = vmatpush1.msra.mxu0 0.0
  %48 = vmatprep.subr.mxu0 0.0
  %49 = vmatpush1.msra.mxu0 0.0
  %50 = vmatprep.subr.mxu0 0.0
  %51 = vmatpush1.msra.mxu0 0.0
  %52 = vmatprep.subr.mxu0 0.0
  %53 = vmatpush1.msra.mxu0 0.0
  %54 = vmatprep.subr.mxu0 0.0
  %55 = vmatpush1.msra.mxu0 0.0
  %56 = vmatprep.subr.mxu0 0.0
  %57 = vmatpush1.msra.mxu0 0.0
  %58 = vmatprep.subr.mxu0 %v16
  %59 = vmatpush1.msra.mxu0 %v15
  %60 = vmatprep.subr.mxu0 0.0
  %61 = vmatpush2.msra.mxu0 0.0
  %62 = vmatprep.subr.mxu0 0.0
  %63 = vmatpush2.msra.mxu0 0.0
  %64 = vmatprep.subr.mxu0 0.0
  %65 = vmatpush2.msra.mxu0 0.0
  %66 = vmatprep.subr.mxu0 0.0
  %67 = vmatpush2.msra.mxu0 0.0
  %68 = vmatprep.subr.mxu0 0.0
  %69 = vmatpush2.msra.mxu0 0.0
  %70 = vmatprep.subr.mxu0 0.0
  %71 = vmatpush2.msra.mxu0 0.0
  %72 = vmatprep.subr.mxu0 0.0
  %73 = vmatpush2.msra.mxu0 0.0
  %74 = vmatprep.subr.mxu0 0.0
  %75 = vmatpush2.msra.mxu0 0.0
  %76 = vmatprep.subr.mxu0 0.0
  %77 = vmatpush2.msra.mxu0 0.0
  %78 = vmatprep.subr.mxu0 0.0
  %79 = vmatpush2.msra.mxu0 0.0
  %80 = vmatprep.subr.mxu0 0.0
  %81 = vmatpush2.msra.mxu0 0.0
  %82 = vmatprep.subr.mxu0 0.0
  %83 = vmatpush2.msra.mxu0 0.0
  %84 = vmatprep.subr.mxu0 0.0
  %85 = vmatpush2.msra.mxu0 0.0
  %86 = vmatprep.subr.mxu0 0.0
  %87 = vmatpush2.msra.mxu0 0.0
  %88 = vmatprep.subr.mxu0 0.0
  %89 = vmatpush2.msra.mxu0 0.0
  %90 = vmatprep.subr.mxu0 0.0
  %91 = vmatpush2.msra.mxu0 0.0
  %92 = vmatprep.mubr.f32.mxu0 0.0
  %93 = vmatmul.mubr.f32.gmra.mxu0 %v26
  %v94 = vpop.f32.mrf.mxu0
  %v95 = vadd.f32 %v22, %v94
  %v96 = vpop.f32.mrf.mxu0
  %v97 = vadd.f32 %v22, %v96
  %98 = vdwg.mxu0
  %99 = vmatprep.subr.mxu0 0.0
  %100 = vmatpush1.msra.mxu0 0.0
  %101 = vmatprep.subr.mxu0 0.0
  %102 = vmatpush1.msra.mxu0 0.0
  %103 = vmatprep.subr.mxu0 0.0
  %104 = vmatpush1.msra.mxu0 0.0
  %105 = vmatprep.subr.mxu0 0.0
  %106 = vmatpush1.msra.mxu0 0.0
  %107 = vmatprep.subr.mxu0 0.0
  %108 = vmatpush1.msra.mxu0 0.0
  %109 = vmatprep.subr.mxu0 0.0
  %110 = vmatpush1.msra.mxu0 0.0
  %111 = vmatprep.subr.mxu0 0.0
  %112 = vmatpush1.msra.mxu0 0.0
  %113 = vmatprep.subr.mxu0 0.0
  %114 = vmatpush1.msra.mxu0 0.0
  %115 = vmatprep.subr.mxu0 0.0
  %116 = vmatpush1.msra.mxu0 0.0
  %117 = vmatprep.subr.mxu0 0.0
  %118 = vmatpush1.msra.mxu0 0.0
  %119 = vmatprep.subr.mxu0 0.0
  %120 = vmatpush1.msra.mxu0 0.0
  %121 = vmatprep.subr.mxu0 0.0
  %122 = vmatpush1.msra.mxu0 0.0
  %123 = vmatprep.subr.mxu0 0.0
  %124 = vmatpush1.msra.mxu0 0.0
  %125 = vmatprep.subr.mxu0 0.0
  %126 = vmatpush1.msra.mxu0 0.0
  %127 = vmatprep.subr.mxu0 0.0
  %128 = vmatpush1.msra.mxu0 0.0
  %129 = vmatprep.subr.mxu0 0.0
  %130 = vmatpush1.msra.mxu0 %v17
  %131 = vmatprep.subr.mxu0 0.0
  %132 = vmatpush2.msra.mxu0 0.0
  %133 = vmatprep.subr.mxu0 0.0
  %134 = vmatpush2.msra.mxu0 0.0
  %135 = vmatprep.subr.mxu0 0.0
  %136 = vmatpush2.msra.mxu0 0.0
  %137 = vmatprep.subr.mxu0 0.0
  %138 = vmatpush2.msra.mxu0 0.0
  %139 = vmatprep.subr.mxu0 0.0
  %140 = vmatpush2.msra.mxu0 0.0
  %141 = vmatprep.subr.mxu0 0.0
  %142 = vmatpush2.msra.mxu0 0.0
  %143 = vmatprep.subr.mxu0 0.0
  %144 = vmatpush2.msra.mxu0 0.0
  %145 = vmatprep.subr.mxu0 0.0
  %146 = vmatpush2.msra.mxu0 0.0
  %147 = vmatprep.subr.mxu0 0.0
  %148 = vmatpush2.msra.mxu0 0.0
  %149 = vmatprep.subr.mxu0 0.0
  %150 = vmatpush2.msra.mxu0 0.0
  %151 = vmatprep.subr.mxu0 0.0
  %152 = vmatpush2.msra.mxu0 0.0
  %153 = vmatprep.subr.mxu0 0.0
  %154 = vmatpush2.msra.mxu0 0.0
  %155 = vmatprep.subr.mxu0 0.0
  %156 = vmatpush2.msra.mxu0 0.0
  %157 = vmatprep.subr.mxu0 0.0
  %158 = vmatpush2.msra.mxu0 0.0
  %159 = vmatprep.subr.mxu0 0.0
  %160 = vmatpush2.msra.mxu0 0.0
  %161 = vmatprep.subr.mxu0 0.0
  %162 = vmatpush2.msra.mxu0 0.0
  %163 = vmatprep.mubr.f32.mxu0 0.0
  %164 = vmatmul.mubr.f32.gmra.mxu0 %v26
  %v165 = vpop.f32.mrf.mxu0
  %v166 = vadd.f32 %v22, %v165
  %v167 = vpop.f32.mrf.mxu0
  %168 = vdwg.mxu0
  %v169 = vmax.f32 %v95, 0.0
  %v170 = vmax.f32 %v97, 0.0
  %v171 = vmax.f32 %v166, 0.0
  %172 = vst [vmem:[%s3] sm:$0xff] %v169
  %173 = vst [vmem:[%s3 + $0x8] sm:$0xff] %v170
  %vm174 = vcmask 261120
  %175 = vst.msk [vmem:[%s3 + $0x10] sm:$0xff] %vm174, %v171
  // Predicated region
  $region14: #{ffc_forward.4} parent=0 // pred_check
    _
  $region15: #{ffc_forward.4} parent=0 // pred_check_branch
    %177 = sbr.rel (0) target = $region17
  $region16: #{ffc_forward.4} parent=0 // pred_region
    _
  $region17: #{ffc_forward.4} parent=0 // pred_fallthru
    _
  // Predicated region
  $region18: #{ffc_forward.4} parent=0 // pred_check
    _
  $region19: #{ffc_forward.4} parent=0 // pred_check_branch
    %179 = sbr.rel (0) target = $region21
  $region20: #{ffc_forward.4} parent=0 // pred_region
    _
  $region21: #{ffc_forward.4} parent=0 // pred_fallthru
    _

// kernel: reverse.1
$region0: #{reverse.1}
  %s0 = inlined_call_operand.vmem [shape: f32[2,2,8,3], index: 0, kind: input, shape index: {}]
  %s1 = inlined_call_operand.vmem [shape: f32[2,2,8,3], index: 1, kind: output, shape index: {}]
  $region1: #{reverse.1} parent=0
    #allocation0 [shape = 'u8[32768]{0}', space=vmem, size = 0x8000, scoped, tag = 'operand span for operand 0']
    #allocation1 [shape = 'u8[16384]{0}', space=vmem, size = 0x4000, scoped, tag = 'packed  for operand 0']
    #allocation2 [shape = 'u8[16384]{0}', space=vmem, size = 0x4000, scoped, tag = 'operand span for operand 1']
    #allocation3 [shape = 'u8[8192]{0}', space=vmem, size = 0x2000, scoped, tag = 'packed  for operand 1']
    %s2 = scalar_lea.vmem [#allocation1], 4
    // Predicated region
    $region2: #{reverse.1} parent=1 // pred_check
      _
    $region3: #{reverse.1} parent=1 // pred_check_branch
      %4 = sbr.rel (0) target = $region5
    $region4: #{reverse.1} parent=1 // pred_region
      // Predicated region
      $region6: #{reverse.1} parent=4 // pred_check
        _
      $region7: #{reverse.1} parent=4 // pred_check_branch
        %6 = sbr.rel target = $region9
      $region8: #{reverse.1} parent=4 // pred_region
        // Predicated region
        $region21: #{reverse.1} parent=8 // pred_check
          _
        $region22: #{reverse.1} parent=8 // pred_check_branch
          %28 = sbr.rel (0) target = $region24
        $region23: #{reverse.1} parent=8 // pred_region
          loop: start=0, step=1, limit=1
          $region25: #{reverse.1} parent=23 // loop_pre_header
            _
          $region26: #{reverse.1} parent=23 // loop_header
            %s30 = sphi 0, %s34
            %p31 = scmp.ge.s32.totalorder %s30, 1
            %s35 = sphi %s0, %s0
            %s36 = sphi %s2, %s2
          $region27: #{reverse.1} parent=23 // loop_header_branch
            %33 = sbr.rel (%p31) target = $region31
          $region28: #{reverse.1} parent=23 // loop_body
            _
          $region29: #{reverse.1} parent=23 // loop_footer
            %s34 = sadd.s32 1, %s30
          $region30: #{reverse.1} parent=23 // loop_footer_branch
            %29 = sbr.rel target = $region26
          $region31: #{reverse.1} parent=23 // loop_exit
            _
          %s38 = ssub.s32 16, 1
          loop: start=0, step=1, limit=1
          $region32: #{reverse.1} parent=23 // loop_pre_header
            _
          $region33: #{reverse.1} parent=23 // loop_header
            %s40 = sphi 0, %s44
            %p41 = scmp.ge.s32.totalorder %s40, 1
            %s45 = sphi %s0, %s0
            %s46 = sphi %s2, %s2
          $region34: #{reverse.1} parent=23 // loop_header_branch
            %43 = sbr.rel (%p41) target = $region38
          $region35: #{reverse.1} parent=23 // loop_body
            %v47 = vld [vmem:[%s45] sm:%s38]
            %48 = vst [vmem:[%s46] sm:%s38] %v47
            %v49 = vld [vmem:[%s45 + $0x4] sm:%s38]
            %50 = vst [vmem:[%s46 + $0x8] sm:%s38] %v49
            %v51 = vld [vmem:[%s45 + $0x8] sm:%s38]
            %52 = vst [vmem:[%s46 + $0x10] sm:%s38] %v51
            %v53 = vld [vmem:[%s45 + $0xc] sm:%s38]
            %54 = vst [vmem:[%s46 + $0x18] sm:%s38] %v53
          $region36: #{reverse.1} parent=23 // loop_footer
            %s44 = sadd.s32 1, %s40
          $region37: #{reverse.1} parent=23 // loop_footer_branch
            %39 = sbr.rel target = $region33
          $region38: #{reverse.1} parent=23 // loop_exit
            _
        $region24: #{reverse.1} parent=8 // pred_fallthru
          _
      $region9: #{reverse.1} parent=4 // pred_fallthru
        _
      // Predicated region
      $region10: #{reverse.1} parent=4 // pred_check
        _
      $region11: #{reverse.1} parent=4 // pred_check_branch
        %8 = sbr.rel (0) target = $region13
      $region12: #{reverse.1} parent=4 // pred_region
        %s10 = ssub.s32 16, 1
        loop: start=0, step=1, limit=1
        $region14: #{reverse.1} parent=12 // loop_pre_header
          _
        $region15: #{reverse.1} parent=12 // loop_header
          %s12 = sphi 0, %s16
          %p13 = scmp.ge.s32.totalorder %s12, 1
          %s17 = sphi %s0, %s0
          %s18 = sphi %s2, %s2
        $region16: #{reverse.1} parent=12 // loop_header_branch
          %15 = sbr.rel (%p13) target = $region20
        $region17: #{reverse.1} parent=12 // loop_body
          %v19 = vld [vmem:[%s17] sm:%s10]
          %20 = vst [vmem:[%s18] sm:%s10] %v19
          %v21 = vld [vmem:[%s17 + $0x4] sm:%s10]
          %22 = vst [vmem:[%s18 + $0x8] sm:%s10] %v21
          %v23 = vld [vmem:[%s17 + $0x8] sm:%s10]
          %24 = vst [vmem:[%s18 + $0x10] sm:%s10] %v23
          %v25 = vld [vmem:[%s17 + $0xc] sm:%s10]
          %26 = vst [vmem:[%s18 + $0x18] sm:%s10] %v25
        $region18: #{reverse.1} parent=12 // loop_footer
          %s16 = sadd.s32 1, %s12
        $region19: #{reverse.1} parent=12 // loop_footer_branch
          %11 = sbr.rel target = $region15
        $region20: #{reverse.1} parent=12 // loop_exit
          _
      $region13: #{reverse.1} parent=4 // pred_fallthru
        _
    $region5: #{reverse.1} parent=1 // pred_fallthru
      _
    %55 = vnop
    %s57 = sshll.u32 1, 4
    %s58 = ssub.s32 %s57, 1
    %s59 = smul.addr 4, 7
    %s60 = scalar_lea.vmem [#allocation1], %s59
    %v61 = vld [vmem:[%s60] sm:%s58]
    %s62 = scalar_lea.vmem [#allocation0], 56
    %63 = vst [vmem:[%s62] sm:%s58] %v61
    %s64 = smul.addr 4, 6
    %s65 = scalar_lea.vmem [#allocation1], %s64
    %v66 = vld [vmem:[%s65] sm:%s58]
    %s67 = scalar_lea.vmem [#allocation0], 48
    %68 = vst [vmem:[%s67] sm:%s58] %v66
    %s69 = smul.addr 4, 5
    %s70 = scalar_lea.vmem [#allocation1], %s69
    %v71 = vld [vmem:[%s70] sm:%s58]
    %s72 = scalar_lea.vmem [#allocation0], 40
    %73 = vst [vmem:[%s72] sm:%s58] %v71
    %s74 = smul.addr 4, 4
    %s75 = scalar_lea.vmem [#allocation1], %s74
    %v76 = vld [vmem:[%s75] sm:%s58]
    %s77 = scalar_lea.vmem [#allocation0], 32
    %78 = vst [vmem:[%s77] sm:%s58] %v76
    %s79 = smul.addr 4, 3
    %s80 = scalar_lea.vmem [#allocation1], %s79
    %v81 = vld [vmem:[%s80] sm:%s58]
    %s82 = scalar_lea.vmem [#allocation0], 24
    %83 = vst [vmem:[%s82] sm:%s58] %v81
    %s84 = smul.addr 4, 2
    %s85 = scalar_lea.vmem [#allocation1], %s84
    %v86 = vld [vmem:[%s85] sm:%s58]
    %s87 = scalar_lea.vmem [#allocation0], 16
    %88 = vst [vmem:[%s87] sm:%s58] %v86
    %s89 = scalar_lea.vmem [#allocation1], 4
    %v90 = vld [vmem:[%s89] sm:%s58]
    %s91 = scalar_lea.vmem [#allocation0], 8
    %92 = vst [vmem:[%s91] sm:%s58] %v90
    %v93 = vld [vmem:[#allocation1] sm:%s58]
    %94 = vst [vmem:[#allocation0] sm:%s58] %v93
    %s95 = scalar_lea.vmem [#allocation0], 7
    %v96 = vld [vmem:[%s95] ss:$-1 sm:$0xff]
    %v97 = vrot.slane %v96, 5
    %98 = vst [vmem:[#allocation2] sm:$0xff] %v97
    %s99 = scalar_lea.vmem [#allocation0], 8
    %s100 = scalar_lea.vmem %s99, 7 [#allocation0]
    %v101 = vld [vmem:[%s100] ss:$-1 sm:$0xff]
    %v102 = vrot.slane %v101, 5
    %v103 = vlaneseq
    %v104 = vshrl.u32 %v103, 7
    %vm105 = vcmp.lt.s32.totalorder %v104, 3
    %106 = vst.msk [vmem:[#allocation2] sm:$0xff] %vm105, %v102
    %s107 = scalar_lea.vmem [#allocation2], 8
    %s108 = scalar_lea.vmem [#allocation0], 16
    %s109 = scalar_lea.vmem %s108, 7 [#allocation0]
    %v110 = vld [vmem:[%s109] ss:$-1 sm:$0xff]
    %v111 = vrot.slane %v110, 5
    %112 = vst [vmem:[%s107] sm:$0xff] %v111
    %s113 = scalar_lea.vmem %s108, 8 [#allocation0]
    %s114 = scalar_lea.vmem %s113, 7 [#allocation0]
    %v115 = vld [vmem:[%s114] ss:$-1 sm:$0xff]
    %v116 = vrot.slane %v115, 5
    %v117 = vlaneseq
    %v118 = vshrl.u32 %v117, 7
    %vm119 = vcmp.lt.s32.totalorder %v118, 3
    %120 = vst.msk [vmem:[%s107] sm:$0xff] %vm119, %v116
    %s121 = scalar_lea.vmem [#allocation2], 16
    %s122 = scalar_lea.vmem [#allocation0], 32
    %s123 = scalar_lea.vmem %s122, 7 [#allocation0]
    %v124 = vld [vmem:[%s123] ss:$-1 sm:$0xff]
    %v125 = vrot.slane %v124, 5
    %126 = vst [vmem:[%s121] sm:$0xff] %v125
    %s127 = scalar_lea.vmem %s122, 8 [#allocation0]
    %s128 = scalar_lea.vmem %s127, 7 [#allocation0]
    %v129 = vld [vmem:[%s128] ss:$-1 sm:$0xff]
    %v130 = vrot.slane %v129, 5
    %v131 = vlaneseq
    %v132 = vshrl.u32 %v131, 7
    %vm133 = vcmp.lt.s32.totalorder %v132, 3
    %134 = vst.msk [vmem:[%s121] sm:$0xff] %vm133, %v130
    %s135 = scalar_lea.vmem [#allocation2], 24
    %s136 = scalar_lea.vmem [#allocation0], 48
    %s137 = scalar_lea.vmem %s136, 7 [#allocation0]
    %v138 = vld [vmem:[%s137] ss:$-1 sm:$0xff]
    %v139 = vrot.slane %v138, 5
    %140 = vst [vmem:[%s135] sm:$0xff] %v139
    %s141 = scalar_lea.vmem %s136, 8 [#allocation0]
    %s142 = scalar_lea.vmem %s141, 7 [#allocation0]
    %v143 = vld [vmem:[%s142] ss:$-1 sm:$0xff]
    %v144 = vrot.slane %v143, 5
    %v145 = vlaneseq
    %v146 = vshrl.u32 %v145, 7
    %vm147 = vcmp.lt.s32.totalorder %v146, 3
    %148 = vst.msk [vmem:[%s135] sm:$0xff] %vm147, %v144
    %s150 = sshll.u32 1, 4
    %s151 = ssub.s32 %s150, 1
    %v153 = vld [vmem:[#allocation2] sm:%s151]
    %s154 = sshll.u32 1, 4
    %s155 = ssub.s32 %s154, 1
    %156 = vst [vmem:[#allocation3] sm:%s155] %v153
    %s157 = scalar_lea.vmem [#allocation2], 8
    %v158 = vld [vmem:[%s157] sm:%s151]
    %s159 = sshll.u32 1, 4
    %s160 = ssub.s32 %s159, 1
    %s161 = scalar_lea.vmem [#allocation3], 4
    %162 = vst [vmem:[%s161] sm:%s160] %v158
    %s163 = scalar_lea.vmem [#allocation2], 16
    %v164 = vld [vmem:[%s163] sm:%s151]
    %s165 = sshll.u32 1, 4
    %s166 = ssub.s32 %s165, 1
    %s167 = smul.addr 4, 2
    %s168 = scalar_lea.vmem [#allocation3], %s167
    %169 = vst [vmem:[%s168] sm:%s166] %v164
    %s170 = scalar_lea.vmem [#allocation2], 24
    %v171 = vld [vmem:[%s170] sm:%s151]
    %s172 = sshll.u32 1, 4
    %s173 = ssub.s32 %s172, 1
    %s174 = smul.addr 4, 3
    %s175 = scalar_lea.vmem [#allocation3], %s174
    %176 = vst [vmem:[%s175] sm:%s173] %v171
    // Predicated region
    $region39: #{reverse.1} parent=1 // pred_check
      _
    $region40: #{reverse.1} parent=1 // pred_check_branch
      %178 = sbr.rel (0) target = $region42
    $region41: #{reverse.1} parent=1 // pred_region
      // Predicated region
      $region43: #{reverse.1} parent=41 // pred_check
        _
      $region44: #{reverse.1} parent=41 // pred_check_branch
        %180 = sbr.rel target = $region46
      $region45: #{reverse.1} parent=41 // pred_region
        // Predicated region
        $region58: #{reverse.1} parent=45 // pred_check
          _
        $region59: #{reverse.1} parent=45 // pred_check_branch
          %202 = sbr.rel (0) target = $region61
        $region60: #{reverse.1} parent=45 // pred_region
          loop: start=0, step=1, limit=1
          $region62: #{reverse.1} parent=60 // loop_pre_header
            _
          $region63: #{reverse.1} parent=60 // loop_header
            %s204 = sphi 0, %s208
            %p205 = scmp.ge.s32.totalorder %s204, 1
            %s209 = sphi [#allocation3], [#allocation3]
            %s210 = sphi %s1, %s1
          $region64: #{reverse.1} parent=60 // loop_header_branch
            %207 = sbr.rel (%p205) target = $region68
          $region65: #{reverse.1} parent=60 // loop_body
            _
          $region66: #{reverse.1} parent=60 // loop_footer
            %s208 = sadd.s32 1, %s204
          $region67: #{reverse.1} parent=60 // loop_footer_branch
            %203 = sbr.rel target = $region63
          $region68: #{reverse.1} parent=60 // loop_exit
            _
          %s212 = ssub.s32 16, 1
          loop: start=0, step=1, limit=1
          $region69: #{reverse.1} parent=60 // loop_pre_header
            _
          $region70: #{reverse.1} parent=60 // loop_header
            %s214 = sphi 0, %s218
            %p215 = scmp.ge.s32.totalorder %s214, 1
            %s219 = sphi [#allocation3], [#allocation3]
            %s220 = sphi %s1, %s1
          $region71: #{reverse.1} parent=60 // loop_header_branch
            %217 = sbr.rel (%p215) target = $region75
          $region72: #{reverse.1} parent=60 // loop_body
            %v221 = vld [vmem:[%s219] sm:%s212]
            %222 = vst [vmem:[%s220] sm:%s212] %v221
            %v223 = vld [vmem:[%s219 + $0x4] sm:%s212]
            %224 = vst [vmem:[%s220 + $0x4] sm:%s212] %v223
            %v225 = vld [vmem:[%s219 + $0x8] sm:%s212]
            %226 = vst [vmem:[%s220 + $0x8] sm:%s212] %v225
            %v227 = vld [vmem:[%s219 + $0xc] sm:%s212]
            %228 = vst [vmem:[%s220 + $0xc] sm:%s212] %v227
          $region73: #{reverse.1} parent=60 // loop_footer
            %s218 = sadd.s32 1, %s214
          $region74: #{reverse.1} parent=60 // loop_footer_branch
            %213 = sbr.rel target = $region70
          $region75: #{reverse.1} parent=60 // loop_exit
            _
        $region61: #{reverse.1} parent=45 // pred_fallthru
          _
      $region46: #{reverse.1} parent=41 // pred_fallthru
        _
      // Predicated region
      $region47: #{reverse.1} parent=41 // pred_check
        _
      $region48: #{reverse.1} parent=41 // pred_check_branch
        %182 = sbr.rel (0) target = $region50
      $region49: #{reverse.1} parent=41 // pred_region
        %s184 = ssub.s32 16, 1
        loop: start=0, step=1, limit=1
        $region51: #{reverse.1} parent=49 // loop_pre_header
          _
        $region52: #{reverse.1} parent=49 // loop_header
          %s186 = sphi 0, %s190
          %p187 = scmp.ge.s32.totalorder %s186, 1
          %s191 = sphi [#allocation3], [#allocation3]
          %s192 = sphi %s1, %s1
        $region53: #{reverse.1} parent=49 // loop_header_branch
          %189 = sbr.rel (%p187) target = $region57
        $region54: #{reverse.1} parent=49 // loop_body
          %v193 = vld [vmem:[%s191] sm:%s184]
          %194 = vst [vmem:[%s192] sm:%s184] %v193
          %v195 = vld [vmem:[%s191 + $0x4] sm:%s184]
          %196 = vst [vmem:[%s192 + $0x4] sm:%s184] %v195
          %v197 = vld [vmem:[%s191 + $0x8] sm:%s184]
          %198 = vst [vmem:[%s192 + $0x8] sm:%s184] %v197
          %v199 = vld [vmem:[%s191 + $0xc] sm:%s184]
          %200 = vst [vmem:[%s192 + $0xc] sm:%s184] %v199
        $region55: #{reverse.1} parent=49 // loop_footer
          %s190 = sadd.s32 1, %s186
        $region56: #{reverse.1} parent=49 // loop_footer_branch
          %185 = sbr.rel target = $region52
        $region57: #{reverse.1} parent=49 // loop_exit
          _
      $region50: #{reverse.1} parent=41 // pred_fallthru
        _
    $region42: #{reverse.1} parent=1 // pred_fallthru
      _
    %229 = vnop

// kernel: tile.9
$region0: #{tile.9}
  %s0 = inlined_call_operand.vmem [shape: f32[2,2,2,8,2,8], index: 0, kind: input, shape index: {}]
  %s1 = inlined_call_operand.vmem [shape: f32[2,2,16,16], index: 1, kind: output, shape index: {}]
  $region1: #{tile.9} parent=0
    #allocation0 [shape = 'u8[262144]{0}', space=vmem, size = 0x40000, scoped, tag = 'scoped mem for input reshape']
    %s3 = sshll.u32 1, 2
    %s4 = ssub.s32 %s3, 1
    %s5 = smul.addr 2, 63
    %s6 = scalar_lea.vmem %s0, %s5
    %v7 = vld [vmem:[%s6] sm:%s4]
    %s8 = scalar_lea.vmem [#allocation0], 504
    %9 = vst [vmem:[%s8] sm:%s4] %v7
    %s10 = smul.addr 2, 62
    %s11 = scalar_lea.vmem %s0, %s10
    %v12 = vld [vmem:[%s11] sm:%s4]
    %s13 = scalar_lea.vmem [#allocation0], 496
    %14 = vst [vmem:[%s13] sm:%s4] %v12
    %s15 = smul.addr 2, 61
    %s16 = scalar_lea.vmem %s0, %s15
    %v17 = vld [vmem:[%s16] sm:%s4]
    %s18 = scalar_lea.vmem [#allocation0], 488
    %19 = vst [vmem:[%s18] sm:%s4] %v17
    %s20 = smul.addr 2, 60
    %s21 = scalar_lea.vmem %s0, %s20
    %v22 = vld [vmem:[%s21] sm:%s4]
    %s23 = scalar_lea.vmem [#allocation0], 480
    %24 = vst [vmem:[%s23] sm:%s4] %v22
    %s25 = smul.addr 2, 59
    %s26 = scalar_lea.vmem %s0, %s25
    %v27 = vld [vmem:[%s26] sm:%s4]
    %s28 = scalar_lea.vmem [#allocation0], 472
    %29 = vst [vmem:[%s28] sm:%s4] %v27
    %s30 = smul.addr 2, 58
    %s31 = scalar_lea.vmem %s0, %s30
    %v32 = vld [vmem:[%s31] sm:%s4]
    %s33 = scalar_lea.vmem [#allocation0], 464
    %34 = vst [vmem:[%s33] sm:%s4] %v32
    %s35 = smul.addr 2, 57
    %s36 = scalar_lea.vmem %s0, %s35
    %v37 = vld [vmem:[%s36] sm:%s4]
    %s38 = scalar_lea.vmem [#allocation0], 456
    %39 = vst [vmem:[%s38] sm:%s4] %v37
    %s40 = smul.addr 2, 56
    %s41 = scalar_lea.vmem %s0, %s40
    %v42 = vld [vmem:[%s41] sm:%s4]
    %s43 = scalar_lea.vmem [#allocation0], 448
    %44 = vst [vmem:[%s43] sm:%s4] %v42
    %s45 = smul.addr 2, 55
    %s46 = scalar_lea.vmem %s0, %s45
    %v47 = vld [vmem:[%s46] sm:%s4]
    %s48 = scalar_lea.vmem [#allocation0], 440
    %49 = vst [vmem:[%s48] sm:%s4] %v47
    %s50 = smul.addr 2, 54
    %s51 = scalar_lea.vmem %s0, %s50
    %v52 = vld [vmem:[%s51] sm:%s4]
    %s53 = scalar_lea.vmem [#allocation0], 432
    %54 = vst [vmem:[%s53] sm:%s4] %v52
    %s55 = smul.addr 2, 53
    %s56 = scalar_lea.vmem %s0, %s55
    %v57 = vld [vmem:[%s56] sm:%s4]
    %s58 = scalar_lea.vmem [#allocation0], 424
    %59 = vst [vmem:[%s58] sm:%s4] %v57
    %s60 = smul.addr 2, 52
    %s61 = scalar_lea.vmem %s0, %s60
    %v62 = vld [vmem:[%s61] sm:%s4]
    %s63 = scalar_lea.vmem [#allocation0], 416
    %64 = vst [vmem:[%s63] sm:%s4] %v62
    %s65 = smul.addr 2, 51
    %s66 = scalar_lea.vmem %s0, %s65
    %v67 = vld [vmem:[%s66] sm:%s4]
    %s68 = scalar_lea.vmem [#allocation0], 408
    %69 = vst [vmem:[%s68] sm:%s4] %v67
    %s70 = smul.addr 2, 50
    %s71 = scalar_lea.vmem %s0, %s70
    %v72 = vld [vmem:[%s71] sm:%s4]
    %s73 = scalar_lea.vmem [#allocation0], 400
    %74 = vst [vmem:[%s73] sm:%s4] %v72
    %s75 = smul.addr 2, 49
    %s76 = scalar_lea.vmem %s0, %s75
    %v77 = vld [vmem:[%s76] sm:%s4]
    %s78 = scalar_lea.vmem [#allocation0], 392
    %79 = vst [vmem:[%s78] sm:%s4] %v77
    %s80 = smul.addr 2, 48
    %s81 = scalar_lea.vmem %s0, %s80
    %v82 = vld [vmem:[%s81] sm:%s4]
    %s83 = scalar_lea.vmem [#allocation0], 384
    %84 = vst [vmem:[%s83] sm:%s4] %v82
    %s85 = smul.addr 2, 47
    %s86 = scalar_lea.vmem %s0, %s85
    %v87 = vld [vmem:[%s86] sm:%s4]
    %s88 = scalar_lea.vmem [#allocation0], 376
    %89 = vst [vmem:[%s88] sm:%s4] %v87
    %s90 = smul.addr 2, 46
    %s91 = scalar_lea.vmem %s0, %s90
    %v92 = vld [vmem:[%s91] sm:%s4]
    %s93 = scalar_lea.vmem [#allocation0], 368
    %94 = vst [vmem:[%s93] sm:%s4] %v92
    %s95 = smul.addr 2, 45
    %s96 = scalar_lea.vmem %s0, %s95
    %v97 = vld [vmem:[%s96] sm:%s4]
    %s98 = scalar_lea.vmem [#allocation0], 360
    %99 = vst [vmem:[%s98] sm:%s4] %v97
    %s100 = smul.addr 2, 44
    %s101 = scalar_lea.vmem %s0, %s100
    %v102 = vld [vmem:[%s101] sm:%s4]
    %s103 = scalar_lea.vmem [#allocation0], 352
    %104 = vst [vmem:[%s103] sm:%s4] %v102
    %s105 = smul.addr 2, 43
    %s106 = scalar_lea.vmem %s0, %s105
    %v107 = vld [vmem:[%s106] sm:%s4]
    %s108 = scalar_lea.vmem [#allocation0], 344
    %109 = vst [vmem:[%s108] sm:%s4] %v107
    %s110 = smul.addr 2, 42
    %s111 = scalar_lea.vmem %s0, %s110
    %v112 = vld [vmem:[%s111] sm:%s4]
    %s113 = scalar_lea.vmem [#allocation0], 336
    %114 = vst [vmem:[%s113] sm:%s4] %v112
    %s115 = smul.addr 2, 41
    %s116 = scalar_lea.vmem %s0, %s115
    %v117 = vld [vmem:[%s116] sm:%s4]
    %s118 = scalar_lea.vmem [#allocation0], 328
    %119 = vst [vmem:[%s118] sm:%s4] %v117
    %s120 = smul.addr 2, 40
    %s121 = scalar_lea.vmem %s0, %s120
    %v122 = vld [vmem:[%s121] sm:%s4]
    %s123 = scalar_lea.vmem [#allocation0], 320
    %124 = vst [vmem:[%s123] sm:%s4] %v122
    %s125 = smul.addr 2, 39
    %s126 = scalar_lea.vmem %s0, %s125
    %v127 = vld [vmem:[%s126] sm:%s4]
    %s128 = scalar_lea.vmem [#allocation0], 312
    %129 = vst [vmem:[%s128] sm:%s4] %v127
    %s130 = smul.addr 2, 38
    %s131 = scalar_lea.vmem %s0, %s130
    %v132 = vld [vmem:[%s131] sm:%s4]
    %s133 = scalar_lea.vmem [#allocation0], 304
    %134 = vst [vmem:[%s133] sm:%s4] %v132
    %s135 = smul.addr 2, 37
    %s136 = scalar_lea.vmem %s0, %s135
    %v137 = vld [vmem:[%s136] sm:%s4]
    %s138 = scalar_lea.vmem [#allocation0], 296
    %139 = vst [vmem:[%s138] sm:%s4] %v137
    %s140 = smul.addr 2, 36
    %s141 = scalar_lea.vmem %s0, %s140
    %v142 = vld [vmem:[%s141] sm:%s4]
    %s143 = scalar_lea.vmem [#allocation0], 288
    %144 = vst [vmem:[%s143] sm:%s4] %v142
    %s145 = smul.addr 2, 35
    %s146 = scalar_lea.vmem %s0, %s145
    %v147 = vld [vmem:[%s146] sm:%s4]
    %s148 = scalar_lea.vmem [#allocation0], 280
    %149 = vst [vmem:[%s148] sm:%s4] %v147
    %s150 = smul.addr 2, 34
    %s151 = scalar_lea.vmem %s0, %s150
    %v152 = vld [vmem:[%s151] sm:%s4]
    %s153 = scalar_lea.vmem [#allocation0], 272
    %154 = vst [vmem:[%s153] sm:%s4] %v152
    %s155 = smul.addr 2, 33
    %s156 = scalar_lea.vmem %s0, %s155
    %v157 = vld [vmem:[%s156] sm:%s4]
    %s158 = scalar_lea.vmem [#allocation0], 264
    %159 = vst [vmem:[%s158] sm:%s4] %v157
    %s160 = smul.addr 2, 32
    %s161 = scalar_lea.vmem %s0, %s160
    %v162 = vld [vmem:[%s161] sm:%s4]
    %s163 = scalar_lea.vmem [#allocation0], 256
    %164 = vst [vmem:[%s163] sm:%s4] %v162
    %s165 = smul.addr 2, 31
    %s166 = scalar_lea.vmem %s0, %s165
    %v167 = vld [vmem:[%s166] sm:%s4]
    %s168 = scalar_lea.vmem [#allocation0], 248
    %169 = vst [vmem:[%s168] sm:%s4] %v167
    %s170 = smul.addr 2, 30
    %s171 = scalar_lea.vmem %s0, %s170
    %v172 = vld [vmem:[%s171] sm:%s4]
    %s173 = scalar_lea.vmem [#allocation0], 240
    %174 = vst [vmem:[%s173] sm:%s4] %v172
    %s175 = smul.addr 2, 29
    %s176 = scalar_lea.vmem %s0, %s175
    %v177 = vld [vmem:[%s176] sm:%s4]
    %s178 = scalar_lea.vmem [#allocation0], 232
    %179 = vst [vmem:[%s178] sm:%s4] %v177
    %s180 = smul.addr 2, 28
    %s181 = scalar_lea.vmem %s0, %s180
    %v182 = vld [vmem:[%s181] sm:%s4]
    %s183 = scalar_lea.vmem [#allocation0], 224
    %184 = vst [vmem:[%s183] sm:%s4] %v182
    %s185 = smul.addr 2, 27
    %s186 = scalar_lea.vmem %s0, %s185
    %v187 = vld [vmem:[%s186] sm:%s4]
    %s188 = scalar_lea.vmem [#allocation0], 216
    %189 = vst [vmem:[%s188] sm:%s4] %v187
    %s190 = smul.addr 2, 26
    %s191 = scalar_lea.vmem %s0, %s190
    %v192 = vld [vmem:[%s191] sm:%s4]
    %s193 = scalar_lea.vmem [#allocation0], 208
    %194 = vst [vmem:[%s193] sm:%s4] %v192
    %s195 = smul.addr 2, 25
    %s196 = scalar_lea.vmem %s0, %s195
    %v197 = vld [vmem:[%s196] sm:%s4]
    %s198 = scalar_lea.vmem [#allocation0], 200
    %199 = vst [vmem:[%s198] sm:%s4] %v197
    %s200 = smul.addr 2, 24
    %s201 = scalar_lea.vmem %s0, %s200
    %v202 = vld [vmem:[%s201] sm:%s4]
    %s203 = scalar_lea.vmem [#allocation0], 192
    %204 = vst [vmem:[%s203] sm:%s4] %v202
    %s205 = smul.addr 2, 23
    %s206 = scalar_lea.vmem %s0, %s205
    %v207 = vld [vmem:[%s206] sm:%s4]
    %s208 = scalar_lea.vmem [#allocation0], 184
    %209 = vst [vmem:[%s208] sm:%s4] %v207
    %s210 = smul.addr 2, 22
    %s211 = scalar_lea.vmem %s0, %s210
    %v212 = vld [vmem:[%s211] sm:%s4]
    %s213 = scalar_lea.vmem [#allocation0], 176
    %214 = vst [vmem:[%s213] sm:%s4] %v212
    %s215 = smul.addr 2, 21
    %s216 = scalar_lea.vmem %s0, %s215
    %v217 = vld [vmem:[%s216] sm:%s4]
    %s218 = scalar_lea.vmem [#allocation0], 168
    %219 = vst [vmem:[%s218] sm:%s4] %v217
    %s220 = smul.addr 2, 20
    %s221 = scalar_lea.vmem %s0, %s220
    %v222 = vld [vmem:[%s221] sm:%s4]
    %s223 = scalar_lea.vmem [#allocation0], 160
    %224 = vst [vmem:[%s223] sm:%s4] %v222
    %s225 = smul.addr 2, 19
    %s226 = scalar_lea.vmem %s0, %s225
    %v227 = vld [vmem:[%s226] sm:%s4]
    %s228 = scalar_lea.vmem [#allocation0], 152
    %229 = vst [vmem:[%s228] sm:%s4] %v227
    %s230 = smul.addr 2, 18
    %s231 = scalar_lea.vmem %s0, %s230
    %v232 = vld [vmem:[%s231] sm:%s4]
    %s233 = scalar_lea.vmem [#allocation0], 144
    %234 = vst [vmem:[%s233] sm:%s4] %v232
    %s235 = smul.addr 2, 17
    %s236 = scalar_lea.vmem %s0, %s235
    %v237 = vld [vmem:[%s236] sm:%s4]
    %s238 = scalar_lea.vmem [#allocation0], 136
    %239 = vst [vmem:[%s238] sm:%s4] %v237
    %s240 = smul.addr 2, 16
    %s241 = scalar_lea.vmem %s0, %s240
    %v242 = vld [vmem:[%s241] sm:%s4]
    %s243 = scalar_lea.vmem [#allocation0], 128
    %244 = vst [vmem:[%s243] sm:%s4] %v242
    %s245 = smul.addr 2, 15
    %s246 = scalar_lea.vmem %s0, %s245
    %v247 = vld [vmem:[%s246] sm:%s4]
    %s248 = scalar_lea.vmem [#allocation0], 120
    %249 = vst [vmem:[%s248] sm:%s4] %v247
    %s250 = smul.addr 2, 14
    %s251 = scalar_lea.vmem %s0, %s250
    %v252 = vld [vmem:[%s251] sm:%s4]
    %s253 = scalar_lea.vmem [#allocation0], 112
    %254 = vst [vmem:[%s253] sm:%s4] %v252
    %s255 = smul.addr 2, 13
    %s256 = scalar_lea.vmem %s0, %s255
    %v257 = vld [vmem:[%s256] sm:%s4]
    %s258 = scalar_lea.vmem [#allocation0], 104
    %259 = vst [vmem:[%s258] sm:%s4] %v257
    %s260 = smul.addr 2, 12
    %s261 = scalar_lea.vmem %s0, %s260
    %v262 = vld [vmem:[%s261] sm:%s4]
    %s263 = scalar_lea.vmem [#allocation0], 96
    %264 = vst [vmem:[%s263] sm:%s4] %v262
    %s265 = smul.addr 2, 11
    %s266 = scalar_lea.vmem %s0, %s265
    %v267 = vld [vmem:[%s266] sm:%s4]
    %s268 = scalar_lea.vmem [#allocation0], 88
    %269 = vst [vmem:[%s268] sm:%s4] %v267
    %s270 = smul.addr 2, 10
    %s271 = scalar_lea.vmem %s0, %s270
    %v272 = vld [vmem:[%s271] sm:%s4]
    %s273 = scalar_lea.vmem [#allocation0], 80
    %274 = vst [vmem:[%s273] sm:%s4] %v272
    %s275 = smul.addr 2, 9
    %s276 = scalar_lea.vmem %s0, %s275
    %v277 = vld [vmem:[%s276] sm:%s4]
    %s278 = scalar_lea.vmem [#allocation0], 72
    %279 = vst [vmem:[%s278] sm:%s4] %v277
    %s280 = smul.addr 2, 8
    %s281 = scalar_lea.vmem %s0, %s280
    %v282 = vld [vmem:[%s281] sm:%s4]
    %s283 = scalar_lea.vmem [#allocation0], 64
    %284 = vst [vmem:[%s283] sm:%s4] %v282
    %s285 = smul.addr 2, 7
    %s286 = scalar_lea.vmem %s0, %s285
    %v287 = vld [vmem:[%s286] sm:%s4]
    %s288 = scalar_lea.vmem [#allocation0], 56
    %289 = vst [vmem:[%s288] sm:%s4] %v287
    %s290 = smul.addr 2, 6
    %s291 = scalar_lea.vmem %s0, %s290
    %v292 = vld [vmem:[%s291] sm:%s4]
    %s293 = scalar_lea.vmem [#allocation0], 48
    %294 = vst [vmem:[%s293] sm:%s4] %v292
    %s295 = smul.addr 2, 5
    %s296 = scalar_lea.vmem %s0, %s295
    %v297 = vld [vmem:[%s296] sm:%s4]
    %s298 = scalar_lea.vmem [#allocation0], 40
    %299 = vst [vmem:[%s298] sm:%s4] %v297
    %s300 = smul.addr 2, 4
    %s301 = scalar_lea.vmem %s0, %s300
    %v302 = vld [vmem:[%s301] sm:%s4]
    %s303 = scalar_lea.vmem [#allocation0], 32
    %304 = vst [vmem:[%s303] sm:%s4] %v302
    %s305 = smul.addr 2, 3
    %s306 = scalar_lea.vmem %s0, %s305
    %v307 = vld [vmem:[%s306] sm:%s4]
    %s308 = scalar_lea.vmem [#allocation0], 24
    %309 = vst [vmem:[%s308] sm:%s4] %v307
    %s310 = smul.addr 2, 2
    %s311 = scalar_lea.vmem %s0, %s310
    %v312 = vld [vmem:[%s311] sm:%s4]
    %s313 = scalar_lea.vmem [#allocation0], 16
    %314 = vst [vmem:[%s313] sm:%s4] %v312
    %s315 = scalar_lea.vmem %s0, 2
    %v316 = vld [vmem:[%s315] sm:%s4]
    %s317 = scalar_lea.vmem [#allocation0], 8
    %318 = vst [vmem:[%s317] sm:%s4] %v316
    %v319 = vld [vmem:[%s0] sm:%s4]
    %320 = vst [vmem:[#allocation0] sm:%s4] %v319
    %v321 = vld [vmem:[#allocation0] ss:$8 sm:$0xf]
    %v322 = vld [vmem:[#allocation0] ss:$8 sm:$0xf0]
    %vm323 = vcmask 1047556
    %v324 = vsel %vm323, %v322, %v321
    %vm325 = vcmask 64512
    %326 = vst.msk [vmem:[%s1] sm:$0xff] %vm325, %v324
    %s327 = scalar_lea.vmem [#allocation0], 64
    %v328 = vld [vmem:[%s327] ss:$8 sm:$0xf]
    %s329 = scalar_lea.vmem [#allocation0], 64
    %v330 = vld [vmem:[%s329] ss:$8 sm:$0xf0]
    %vm331 = vcmask 1047556
    %v332 = vsel %vm331, %v330, %v328
    %vm333 = vcmask 64512
    %s334 = scalar_lea.vmem %s1, 8
    %335 = vst.msk [vmem:[%s334] sm:$0xff] %vm333, %v332
    %s336 = scalar_lea.vmem [#allocation0], 128
    %v337 = vld [vmem:[%s336] ss:$8 sm:$0xf]
    %s338 = scalar_lea.vmem [#allocation0], 128
    %v339 = vld [vmem:[%s338] ss:$8 sm:$0xf0]
    %vm340 = vcmask 1047556
    %v341 = vsel %vm340, %v339, %v337
    %vm342 = vcmask 64512
    %s343 = scalar_lea.vmem %s1, 16
    %344 = vst.msk [vmem:[%s343] sm:$0xff] %vm342, %v341
    %s345 = scalar_lea.vmem [#allocation0], 192
    %v346 = vld [vmem:[%s345] ss:$8 sm:$0xf]
    %s347 = scalar_lea.vmem [#allocation0], 192
    %v348 = vld [vmem:[%s347] ss:$8 sm:$0xf0]
    %vm349 = vcmask 1047556
    %v350 = vsel %vm349, %v348, %v346
    %vm351 = vcmask 64512
    %s352 = scalar_lea.vmem %s1, 24
    %353 = vst.msk [vmem:[%s352] sm:$0xff] %vm351, %v350
    %s354 = scalar_lea.vmem [#allocation0], 256
    %v355 = vld [vmem:[%s354] ss:$8 sm:$0xf]
    %s356 = scalar_lea.vmem [#allocation0], 256
    %v357 = vld [vmem:[%s356] ss:$8 sm:$0xf0]
    %vm358 = vcmask 1047556
    %v359 = vsel %vm358, %v357, %v355
    %vm360 = vcmask 64512
    %s361 = scalar_lea.vmem %s1, 32
    %362 = vst.msk [vmem:[%s361] sm:$0xff] %vm360, %v359
    %s363 = scalar_lea.vmem [#allocation0], 320
    %v364 = vld [vmem:[%s363] ss:$8 sm:$0xf]
    %s365 = scalar_lea.vmem [#allocation0], 320
    %v366 = vld [vmem:[%s365] ss:$8 sm:$0xf0]
    %vm367 = vcmask 1047556
    %v368 = vsel %vm367, %v366, %v364
    %vm369 = vcmask 64512
    %s370 = scalar_lea.vmem %s1, 40
    %371 = vst.msk [vmem:[%s370] sm:$0xff] %vm369, %v368
    %s372 = scalar_lea.vmem [#allocation0], 384
    %v373 = vld [vmem:[%s372] ss:$8 sm:$0xf]
    %s374 = scalar_lea.vmem [#allocation0], 384
    %v375 = vld [vmem:[%s374] ss:$8 sm:$0xf0]
    %vm376 = vcmask 1047556
    %v377 = vsel %vm376, %v375, %v373
    %vm378 = vcmask 64512
    %s379 = scalar_lea.vmem %s1, 48
    %380 = vst.msk [vmem:[%s379] sm:$0xff] %vm378, %v377
    %s381 = scalar_lea.vmem [#allocation0], 448
    %v382 = vld [vmem:[%s381] ss:$8 sm:$0xf]
    %s383 = scalar_lea.vmem [#allocation0], 448
    %v384 = vld [vmem:[%s383] ss:$8 sm:$0xf0]
    %vm385 = vcmask 1047556
    %v386 = vsel %vm385, %v384, %v382
    %vm387 = vcmask 64512
    %s388 = scalar_lea.vmem %s1, 56
    %389 = vst.msk [vmem:[%s388] sm:$0xff] %vm387, %v386
    %s390 = scalar_lea.vmem [#allocation0], 1
    %v391 = vld [vmem:[%s390] ss:$8 sm:$0xf]
    %s392 = scalar_lea.vmem [#allocation0], 1
    %v393 = vld [vmem:[%s392] ss:$8 sm:$0xf0]
    %vm394 = vcmask 1047556
    %v395 = vsel %vm394, %v393, %v391
    %396 = vrot.lane.b32.xlu0 %v395, 8
    %v397 = vpop.permute.xlu0 %396
    %vm398 = vcmask 130112
    %399 = vst.msk [vmem:[%s1] sm:$0xff] %vm398, %v397
    %s400 = scalar_lea.vmem [#allocation0], 257
    %v401 = vld [vmem:[%s400] ss:$8 sm:$0xf]
    %s402 = scalar_lea.vmem [#allocation0], 257
    %v403 = vld [vmem:[%s402] ss:$8 sm:$0xf0]
    %vm404 = vcmask 1047556
    %v405 = vsel %vm404, %v403, %v401
    %406 = vrot.lane.b32.xlu0 %v405, 8
    %v407 = vpop.permute.xlu0 %406
    %vm408 = vcmask 130112
    %s409 = scalar_lea.vmem %s1, 32
    %410 = vst.msk [vmem:[%s409] sm:$0xff] %vm408, %v407
    %s411 = scalar_lea.vmem [#allocation0], 65
    %v412 = vld [vmem:[%s411] ss:$8 sm:$0xf]
    %s413 = scalar_lea.vmem [#allocation0], 65
    %v414 = vld [vmem:[%s413] ss:$8 sm:$0xf0]
    %vm415 = vcmask 1047556
    %v416 = vsel %vm415, %v414, %v412
    %417 = vrot.lane.b32.xlu0 %v416, 8
    %v418 = vpop.permute.xlu0 %417
    %vm419 = vcmask 130112
    %s420 = scalar_lea.vmem %s1, 8
    %421 = vst.msk [vmem:[%s420] sm:$0xff] %vm419, %v418
    %s422 = scalar_lea.vmem [#allocation0], 321
    %v423 = vld [vmem:[%s422] ss:$8 sm:$0xf]
    %s424 = scalar_lea.vmem [#allocation0], 321
    %v425 = vld [vmem:[%s424] ss:$8 sm:$0xf0]
    %vm426 = vcmask 1047556
    %v427 = vsel %vm426, %v425, %v423
    %428 = vrot.lane.b32.xlu0 %v427, 8
    %v429 = vpop.permute.xlu0 %428
    %vm430 = vcmask 130112
    %s431 = scalar_lea.vmem %s1, 40
    %432 = vst.msk [vmem:[%s431] sm:$0xff] %vm430, %v429
    %s433 = scalar_lea.vmem [#allocation0], 129
    %v434 = vld [vmem:[%s433] ss:$8 sm:$0xf]
    %s435 = scalar_lea.vmem [#allocation0], 129
    %v436 = vld [vmem:[%s435] ss:$8 sm:$0xf0]
    %vm437 = vcmask 1047556
    %v438 = vsel %vm437, %v436, %v434
    %439 = vrot.lane.b32.xlu0 %v438, 8
    %v440 = vpop.permute.xlu0 %439
    %vm441 = vcmask 130112
    %s442 = scalar_lea.vmem %s1, 16
    %443 = vst.msk [vmem:[%s442] sm:$0xff] %vm441, %v440
    %s444 = scalar_lea.vmem [#allocation0], 385
    %v445 = vld [vmem:[%s444] ss:$8 sm:$0xf]
    %s446 = scalar_lea.vmem [#allocation0], 385
    %v447 = vld [vmem:[%s446] ss:$8 sm:$0xf0]
    %vm448 = vcmask 1047556
    %v449 = vsel %vm448, %v447, %v445
    %450 = vrot.lane.b32.xlu0 %v449, 8
    %v451 = vpop.permute.xlu0 %450
    %vm452 = vcmask 130112
    %s453 = scalar_lea.vmem %s1, 48
    %454 = vst.msk [vmem:[%s453] sm:$0xff] %vm452, %v451
    %s455 = scalar_lea.vmem [#allocation0], 193
    %v456 = vld [vmem:[%s455] ss:$8 sm:$0xf]
    %s457 = scalar_lea.vmem [#allocation0], 193
    %v458 = vld [vmem:[%s457] ss:$8 sm:$0xf0]
    %vm459 = vcmask 1047556
    %v460 = vsel %vm459, %v458, %v456
    %461 = vrot.lane.b32.xlu0 %v460, 8
    %v462 = vpop.permute.xlu0 %461
    %vm463 = vcmask 130112
    %s464 = scalar_lea.vmem %s1, 24
    %465 = vst.msk [vmem:[%s464] sm:$0xff] %vm463, %v462
    %s466 = scalar_lea.vmem [#allocation0], 449
    %v467 = vld [vmem:[%s466] ss:$8 sm:$0xf]
    %s468 = scalar_lea.vmem [#allocation0], 449
    %v469 = vld [vmem:[%s468] ss:$8 sm:$0xf0]
    %vm470 = vcmask 1047556
    %v471 = vsel %vm470, %v469, %v467
    %472 = vrot.lane.b32.xlu0 %v471, 8
    %v473 = vpop.permute.xlu0 %472
    %vm474 = vcmask 130112
    %s475 = scalar_lea.vmem %s1, 56
    %476 = vst.msk [vmem:[%s475] sm:$0xff] %vm474, %v473

// kernel: ffc_forward.5
$region0: #{ffc_forward.5}
  #allocation0 [shape = 'u32[]', space=smem, size = 0x4, offset = 0x4, fixed_abs, tag = 'smem constant byte address 0x4 - core index']
  #allocation1 [shape = 'u32[144,128]{1,0:T(1,128)}', space=vmem, size = 0x12000, scoped, tag = 'internal scratch']
  %s0 = inlined_call_operand.vmem [shape: f32[2,512], index: 0, kind: input, shape index: {}]
  %s1 = inlined_call_operand.vmem [shape: f32[4,2], index: 1, kind: input, shape index: {}]
  %s2 = inlined_call_operand.vmem [shape: f32[4,512], index: 2, kind: input, shape index: {}]
  %s3 = inlined_call_operand.vmem [shape: f32[4,512], index: 3, kind: output, shape index: {}]
  %s4 = sld [smem:[#allocation0]]
  $region22: #{ffc_forward.5} parent=0
    _
  %s6 = ssub.s32 1, %s4
  %s7 = scalar_select 0, %s6, %s4
  // Predicated region
  $region2: #{ffc_forward.5} parent=0 // pred_check
    _
  $region3: #{ffc_forward.5} parent=0 // pred_check_branch
    %9 = sbr.rel (0) target = $region5
  $region4: #{ffc_forward.5} parent=0 // pred_region
    _
  $region5: #{ffc_forward.5} parent=0 // pred_fallthru
    _
  // Predicated region
  $region6: #{ffc_forward.5} parent=0 // pred_check
    _
  $region7: #{ffc_forward.5} parent=0 // pred_check_branch
    %11 = sbr.rel (0) target = $region9
  $region8: #{ffc_forward.5} parent=0 // pred_region
    _
  $region9: #{ffc_forward.5} parent=0 // pred_fallthru
    _
  // Predicated region
  $region10: #{ffc_forward.5} parent=0 // pred_check
    _
  $region11: #{ffc_forward.5} parent=0 // pred_check_branch
    %13 = sbr.rel (0) target = $region13
  $region12: #{ffc_forward.5} parent=0 // pred_region
    _
  $region13: #{ffc_forward.5} parent=0 // pred_fallthru
    _
  %v14 = vld [vmem:[%s1] sm:$0xf]
  %v15 = vld [vmem:[%s0] sm:$0xff]
  %v16 = vld [vmem:[%s2] sm:$0xff]
  %v17 = vld [vmem:[%s2 + $0x8] sm:$0xff]
  %v19 = vcombine.high %v15, %v15
  %v21 = vunpack.c.l.s4 1983009808
  %v22 = vunpack.c.0.s8 %v21
  %v23 = vlaneseq
  %v24 = vshrl.u32 %v23, 7
  %v25 = vsub.s32 %v22, %v24
  %v26 = vrot.slane %v15, %v25
  %v28 = vunpack.c.l.s4 1983009808
  %v29 = vunpack.c.0.s8 %v28
  %v30 = vlaneseq
  %v31 = vshrl.u32 %v30, 7
  %v32 = vsub.s32 %v29, %v31
  %v33 = vrot.slane %v19, %v32
  %v34 = vcombine.high %v26, %v26
  %v35 = vcombine.high %v33, %v33
  %v38 = vcombine.high %v16, %v16
  %v39 = vcombine.high %v17, %v17
  %vm42 = vcmask 15360
  %v44 = vsel %vm42, %v14, 0
  %vm46 = vcmask 1041408
  %v47 = vsel %vm46, %v26, 0
  %v49 = vsel %vm46, %v34, 0
  %v51 = vsel %vm46, %v33, 0
  %v53 = vsel %vm46, %v35, 0
  %55 = vmatprep.subr.mxu0 0.0
  %56 = vmatpush1.msra.mxu0 0.0
  %57 = vmatprep.subr.mxu0 0.0
  %58 = vmatpush1.msra.mxu0 0.0
  %59 = vmatprep.subr.mxu0 0.0
  %60 = vmatpush1.msra.mxu0 0.0
  %61 = vmatprep.subr.mxu0 0.0
  %62 = vmatpush1.msra.mxu0 0.0
  %63 = vmatprep.subr.mxu0 0.0
  %64 = vmatpush1.msra.mxu0 0.0
  %65 = vmatprep.subr.mxu0 0.0
  %66 = vmatpush1.msra.mxu0 0.0
  %67 = vmatprep.subr.mxu0 0.0
  %68 = vmatpush1.msra.mxu0 0.0
  %69 = vmatprep.subr.mxu0 0.0
  %70 = vmatpush1.msra.mxu0 0.0
  %71 = vmatprep.subr.mxu0 0.0
  %72 = vmatpush1.msra.mxu0 0.0
  %73 = vmatprep.subr.mxu0 0.0
  %74 = vmatpush1.msra.mxu0 0.0
  %75 = vmatprep.subr.mxu0 0.0
  %76 = vmatpush1.msra.mxu0 0.0
  %77 = vmatprep.subr.mxu0 0.0
  %78 = vmatpush1.msra.mxu0 0.0
  %79 = vmatprep.subr.mxu0 0.0
  %80 = vmatpush1.msra.mxu0 0.0
  %81 = vmatprep.subr.mxu0 0.0
  %82 = vmatpush1.msra.mxu0 0.0
  %83 = vmatprep.subr.mxu0 0.0
  %84 = vmatpush1.msra.mxu0 0.0
  %85 = vmatprep.subr.mxu0 %v49
  %86 = vmatpush1.msra.mxu0 %v47
  %87 = vmatprep.subr.mxu0 0.0
  %88 = vmatpush2.msra.mxu0 0.0
  %89 = vmatprep.subr.mxu0 0.0
  %90 = vmatpush2.msra.mxu0 0.0
  %91 = vmatprep.subr.mxu0 0.0
  %92 = vmatpush2.msra.mxu0 0.0
  %93 = vmatprep.subr.mxu0 0.0
  %94 = vmatpush2.msra.mxu0 0.0
  %95 = vmatprep.subr.mxu0 0.0
  %96 = vmatpush2.msra.mxu0 0.0
  %97 = vmatprep.subr.mxu0 0.0
  %98 = vmatpush2.msra.mxu0 0.0
  %99 = vmatprep.subr.mxu0 0.0
  %100 = vmatpush2.msra.mxu0 0.0
  %101 = vmatprep.subr.mxu0 0.0
  %102 = vmatpush2.msra.mxu0 0.0
  %103 = vmatprep.subr.mxu0 0.0
  %104 = vmatpush2.msra.mxu0 0.0
  %105 = vmatprep.subr.mxu0 0.0
  %106 = vmatpush2.msra.mxu0 0.0
  %107 = vmatprep.subr.mxu0 0.0
  %108 = vmatpush2.msra.mxu0 0.0
  %109 = vmatprep.subr.mxu0 0.0
  %110 = vmatpush2.msra.mxu0 0.0
  %111 = vmatprep.subr.mxu0 0.0
  %112 = vmatpush2.msra.mxu0 0.0
  %113 = vmatprep.subr.mxu0 0.0
  %114 = vmatpush2.msra.mxu0 0.0
  %115 = vmatprep.subr.mxu0 0.0
  %116 = vmatpush2.msra.mxu0 0.0
  %117 = vmatprep.subr.mxu0 0.0
  %118 = vmatpush2.msra.mxu0 0.0
  %119 = vmatprep.mubr.f32.mxu0 0.0
  %120 = vmatmul.mubr.f32.gmra.mxu0 %v44
  %v121 = vpop.f32.mrf.mxu0
  %v122 = vadd.f32 %v16, %v121
  %v123 = vpop.f32.mrf.mxu0
  %v124 = vadd.f32 %v38, %v123
  %125 = vdwg.mxu0
  %126 = vmatprep.subr.mxu0 0.0
  %127 = vmatpush1.msra.mxu0 0.0
  %128 = vmatprep.subr.mxu0 0.0
  %129 = vmatpush1.msra.mxu0 0.0
  %130 = vmatprep.subr.mxu0 0.0
  %131 = vmatpush1.msra.mxu0 0.0
  %132 = vmatprep.subr.mxu0 0.0
  %133 = vmatpush1.msra.mxu0 0.0
  %134 = vmatprep.subr.mxu0 0.0
  %135 = vmatpush1.msra.mxu0 0.0
  %136 = vmatprep.subr.mxu0 0.0
  %137 = vmatpush1.msra.mxu0 0.0
  %138 = vmatprep.subr.mxu0 0.0
  %139 = vmatpush1.msra.mxu0 0.0
  %140 = vmatprep.subr.mxu0 0.0
  %141 = vmatpush1.msra.mxu0 0.0
  %142 = vmatprep.subr.mxu0 0.0
  %143 = vmatpush1.msra.mxu0 0.0
  %144 = vmatprep.subr.mxu0 0.0
  %145 = vmatpush1.msra.mxu0 0.0
  %146 = vmatprep.subr.mxu0 0.0
  %147 = vmatpush1.msra.mxu0 0.0
  %148 = vmatprep.subr.mxu0 0.0
  %149 = vmatpush1.msra.mxu0 0.0
  %150 = vmatprep.subr.mxu0 0.0
  %151 = vmatpush1.msra.mxu0 0.0
  %152 = vmatprep.subr.mxu0 0.0
  %153 = vmatpush1.msra.mxu0 0.0
  %154 = vmatprep.subr.mxu0 0.0
  %155 = vmatpush1.msra.mxu0 0.0
  %156 = vmatprep.subr.mxu0 %v53
  %157 = vmatpush1.msra.mxu0 %v51
  %158 = vmatprep.subr.mxu0 0.0
  %159 = vmatpush2.msra.mxu0 0.0
  %160 = vmatprep.subr.mxu0 0.0
  %161 = vmatpush2.msra.mxu0 0.0
  %162 = vmatprep.subr.mxu0 0.0
  %163 = vmatpush2.msra.mxu0 0.0
  %164 = vmatprep.subr.mxu0 0.0
  %165 = vmatpush2.msra.mxu0 0.0
  %166 = vmatprep.subr.mxu0 0.0
  %167 = vmatpush2.msra.mxu0 0.0
  %168 = vmatprep.subr.mxu0 0.0
  %169 = vmatpush2.msra.mxu0 0.0
  %170 = vmatprep.subr.mxu0 0.0
  %171 = vmatpush2.msra.mxu0 0.0
  %172 = vmatprep.subr.mxu0 0.0
  %173 = vmatpush2.msra.mxu0 0.0
  %174 = vmatprep.subr.mxu0 0.0
  %175 = vmatpush2.msra.mxu0 0.0
  %176 = vmatprep.subr.mxu0 0.0
  %177 = vmatpush2.msra.mxu0 0.0
  %178 = vmatprep.subr.mxu0 0.0
  %179 = vmatpush2.msra.mxu0 0.0
  %180 = vmatprep.subr.mxu0 0.0
  %181 = vmatpush2.msra.mxu0 0.0
  %182 = vmatprep.subr.mxu0 0.0
  %183 = vmatpush2.msra.mxu0 0.0
  %184 = vmatprep.subr.mxu0 0.0
  %185 = vmatpush2.msra.mxu0 0.0
  %186 = vmatprep.subr.mxu0 0.0
  %187 = vmatpush2.msra.mxu0 0.0
  %188 = vmatprep.subr.mxu0 0.0
  %189 = vmatpush2.msra.mxu0 0.0
  %190 = vmatprep.mubr.f32.mxu0 0.0
  %191 = vmatmul.mubr.f32.gmra.mxu0 %v44
  %v192 = vpop.f32.mrf.mxu0
  %v193 = vadd.f32 %v17, %v192
  %v194 = vpop.f32.mrf.mxu0
  %v195 = vadd.f32 %v39, %v194
  %196 = vdwg.mxu0
  %v201 = vcombine.low %v122, %v124
  %v202 = vcombine.low %v193, %v195
  %205 = vst [vmem:[%s3] sm:$0xff] %v201
  %206 = vst [vmem:[%s3 + $0x8] sm:$0xff] %v202
  // Predicated region
  $region14: #{ffc_forward.5} parent=0 // pred_check
    _
  $region15: #{ffc_forward.5} parent=0 // pred_check_branch
    %208 = sbr.rel (0) target = $region17
  $region16: #{ffc_forward.5} parent=0 // pred_region
    _
  $region17: #{ffc_forward.5} parent=0 // pred_fallthru
    _
  // Predicated region
  $region18: #{ffc_forward.5} parent=0 // pred_check
    _
  $region19: #{ffc_forward.5} parent=0 // pred_check_branch
    %210 = sbr.rel (0) target = $region21
  $region20: #{ffc_forward.5} parent=0 // pred_region
    _
  $region21: #{ffc_forward.5} parent=0 // pred_fallthru
    _

</llo_original>
